<compile_context>
chip_gen: v7x
topology: tpu7x:2x2x1
jax: 0.10.0
libtpu: 0.0.40
codegen_flags: <defaults>
</compile_context>

<pallas_src>
import jax
import jax.numpy as jnp
from jax.experimental import pallas as pl
from jax.experimental.pallas import tpu as pltpu

DIM = 128
IN_FEATURES = 2244
K_PAD = 2304                      # 18 * 128: lane-aligned contraction dim
FACTOR_T = [-1.0, -1.0, -1.0]
MAX_TB = 512                      # batch tile; ~85% of HBM roofline per measured data


def net_plain_kernel(x_ref, w0q_ref, s0_ref, b0_ref, w1_ref, b1_ref, o_ref, xp_ref):
    """One batch tile of Net_plain.forward (test_hdc=True path)."""
    tb = xp_ref.shape[0]

    # ---- in-kernel activation bf16 cast + zero-pad (pure vreg/VMEM work) ----
    xp_ref[:, :IN_FEATURES] = x_ref[...].astype(jnp.bfloat16)
    xp_ref[:, IN_FEATURES:] = jnp.zeros((tb, K_PAD - IN_FEATURES), jnp.bfloat16)

    # ---- fc0: dequantize int8 per-output-channel weights -> bf16, MXU matmul ----
    # (int8 HBM fetch is half of bf16; MXU always sees bf16 -> valid on all gens.)
    w0 = (w0q_ref[...] * s0_ref[...]).astype(jnp.bfloat16)              # (K_PAD, DIM)
    h = jnp.dot(xp_ref[...], w0,
                preferred_element_type=jnp.float32) + b0_ref[...]       # (TB, DIM) f32

    thr0 = jnp.float32(2.0 ** 31 / FACTOR_T[0])                         # = -2^31
    h = jnp.where(h <= thr0, jnp.float32(0.0), h)
    h = jnp.where(h >= thr0, jnp.float32(1.0), h)

    # ---- fc0_: (TB,128) @ (128,128), bf16 operands / f32 accumulate ----
    # h is exactly {0,1} (or NaN passthrough) here, so the bf16 cast is lossless.
    h = jnp.dot(h.astype(jnp.bfloat16), w1_ref[...],
                preferred_element_type=jnp.float32) + b1_ref[...]

    thr1 = jnp.float32(2.0 ** 31 / FACTOR_T[1])
    h = jnp.where(h <= thr1, jnp.float32(0.0), h)
    h = jnp.where(h >= thr1, jnp.float32(1.0), h)

    o_ref[...] = h


def prepare_params(w0, b0, w0_, b0_):
    """ONE-TIME (model-init) weight prep.

    fc0 weight: PyTorch (out, in) f32 -> (in, out), contraction dim zero-padded
    2244 -> 2304, then symmetric per-output-channel int8 quantization.
    fc0_ weight: (in, out) bf16. Biases stay f32, reshaped (1, 128).
    """
    w0 = jnp.asarray(w0, jnp.float32)
    w0_t = jnp.zeros((K_PAD, DIM), jnp.float32).at[:IN_FEATURES, :].set(w0.T)
    absmax = jnp.max(jnp.abs(w0_t), axis=0, keepdims=True)              # (1, DIM)
    scale = jnp.where(absmax > 0, absmax / 127.0, jnp.float32(1.0))     # (1, DIM)
    w0q = jnp.clip(jnp.round(w0_t / scale), -127, 127).astype(jnp.int8)  # (K_PAD, DIM)

    w1_t = jnp.asarray(w0_, jnp.float32).T.astype(jnp.bfloat16)          # (128, 128)
    b0_r = jnp.asarray(b0, jnp.float32).reshape(1, DIM)                  # (1, 128)
    b1_r = jnp.asarray(b0_, jnp.float32).reshape(1, DIM)                 # (1, 128)
    return w0q, scale, b0_r, w1_t, b1_r


@jax.jit
def net_plain_forward(x, w0q, s0, b0, w1, b1):
    """x: (B, ...) flattened to (B, 2244). Params come from prepare_params()."""
    B = x.shape[0]
    x2 = x.reshape(B, -1)                                   # torch.flatten(x, 1)
    assert x2.shape[1] == IN_FEATURES

    tb = B if B <= MAX_TB else MAX_TB                       # batch tile
    grid = (pl.cdiv(B, tb),)

    return pl.pallas_call(
        net_plain_kernel,
        out_shape=jax.ShapeDtypeStruct((B, DIM), jnp.float32),
        grid=grid,
        in_specs=[
            pl.BlockSpec((tb, IN_FEATURES), lambda i: (i, 0)),    # x tile (f32)
            pl.BlockSpec((K_PAD, DIM),      lambda i: (0, 0)),    # w0 int8 (resident)
            pl.BlockSpec((1, DIM),          lambda i: (0, 0)),    # per-channel scale
            pl.BlockSpec((1, DIM),          lambda i: (0, 0)),    # b0
            pl.BlockSpec((DIM, DIM),        lambda i: (0, 0)),    # w1 bf16 (resident)
            pl.BlockSpec((1, DIM),          lambda i: (0, 0)),    # b1
        ],
        out_specs=pl.BlockSpec((tb, DIM), lambda i: (i, 0)),
        scratch_shapes=[pltpu.VMEM((tb, K_PAD), jnp.bfloat16)],   # padded activations
        compiler_params=pltpu.CompilerParams(
            dimension_semantics=("parallel",)),                   # v7x: shard over 2 TCs
    )(x2, w0q, s0, b0, w1, b1)


def _linear_init(key, out_f, in_f):
    # PyTorch nn.Linear default: U(-1/sqrt(fan_in), 1/sqrt(fan_in))
    kw, kb = jax.random.split(key)
    bound = 1.0 / jnp.sqrt(jnp.float32(in_f))
    w = jax.random.uniform(kw, (out_f, in_f), jnp.float32, -bound, bound)
    b = jax.random.uniform(kb, (out_f,), jnp.float32, -bound, bound)
    return w, b


def reference_forward(x, w0, b0, w0_, b0_):
    # Pure-JAX f32 reference mirroring the PyTorch forward exactly.
    B = x.shape[0]
    h = x.reshape(B, -1).astype(jnp.float32)
    h = h @ w0.T + b0
    thr = 2.0 ** 31 / FACTOR_T[0]
    h = jnp.where(h <= thr, 0.0, h)
    h = jnp.where(h >= thr, 1.0, h)
    h = h @ w0_.T + b0_
    thr = 2.0 ** 31 / FACTOR_T[1]
    h = jnp.where(h <= thr, 0.0, h)
    h = jnp.where(h >= thr, 1.0, h)
    return h


if __name__ == "__main__":
    key = jax.random.PRNGKey(0)
    k_x, k0, k1 = jax.random.split(key, 3)

    B = 16   # >= 16 fills bf16 sublane packing; per-sample cost drops ~linearly with B
    # Input: (B, 1, 2244) — flattened to (B, 2244) by the wrapper (2244 fixed by fc0).
    x = jax.random.normal(k_x, (B, 1, IN_FEATURES), jnp.float32)

    w0, b0 = _linear_init(k0, DIM, IN_FEATURES)   # fc0
    w0_, b0_ = _linear_init(k1, DIM, DIM)         # fc0_
    # Bn0/Bn0_/Bn0_1/fc1 exist in __init__ but are unused in forward (test_hdc=True).

    params = prepare_params(w0, b0, w0_, b0_)     # one-time weight prep

    out = net_plain_forward(x, *params)
    out = jax.block_until_ready(out)

    ref = reference_forward(x, w0, b0, w0_, b0_)
    assert out.shape == (B, DIM)
    # Post-threshold activations are exactly {0,1} (factor_t=-1 puts thresholds at
    # -2^31), so int8/bf16 operand quantization cannot flip any comparison.
    assert jnp.allclose(out, ref, atol=1e-2, rtol=1e-2), "mismatch vs reference"

    print("KERNEL_OK")
</pallas_src>

<mosaic_0001>
module attributes {stable_mosaic.version = 11 : i64} {
  func.func @net_plain_kernel(%arg0: i32, %arg1: memref<16x2244xf32, #tpu.memory_space<vmem>>, %arg2: memref<2304x128xi8, #tpu.memory_space<vmem>>, %arg3: memref<1x128xf32, #tpu.memory_space<vmem>>, %arg4: memref<1x128xf32, #tpu.memory_space<vmem>>, %arg5: memref<128x128xbf16, #tpu.memory_space<vmem>>, %arg6: memref<1x128xf32, #tpu.memory_space<vmem>>, %arg7: memref<16x128xf32, #tpu.memory_space<vmem>>, %arg8: memref<16x2304xbf16, #tpu.memory_space<vmem>>) attributes {dimension_semantics = [#tpu.dimension_semantics<parallel>], iteration_bounds = array<i64: 1>, scalar_prefetch = 0 : i64, scratch_operands = 1 : i64, tpu.core_type = #tpu.core_type<tc>, window_params = [{transform_indices = @transform_0, window_bounds = array<i64: 16, 2244>}, {pipeline_mode = #tpu.pipeline_mode<synchronous>, transform_indices = @transform_1, window_bounds = array<i64: 2304, 128>}, {pipeline_mode = #tpu.pipeline_mode<synchronous>, transform_indices = @transform_2, window_bounds = array<i64: 1, 128>}, {pipeline_mode = #tpu.pipeline_mode<synchronous>, transform_indices = @transform_3, window_bounds = array<i64: 1, 128>}, {pipeline_mode = #tpu.pipeline_mode<synchronous>, transform_indices = @transform_4, window_bounds = array<i64: 128, 128>}, {pipeline_mode = #tpu.pipeline_mode<synchronous>, transform_indices = @transform_5, window_bounds = array<i64: 1, 128>}, {transform_indices = @transform_6, window_bounds = array<i64: 16, 128>}]} {
    %c0 = arith.constant 0 : index
    %c0_0 = arith.constant 0 : index
    %0 = vector.load %arg1[%c0, %c0_0] : memref<16x2244xf32, #tpu.memory_space<vmem>>, vector<16x2244xf32>
    %1 = arith.truncf %0 : vector<16x2244xf32> to vector<16x2244xbf16>
    %c0_1 = arith.constant 0 : index
    %c0_2 = arith.constant 0 : index
    %2 = vector.load %arg8[%c0_1, %c0_2] : memref<16x2304xbf16, #tpu.memory_space<vmem>>, vector<16x2244xbf16>
    tpu.vector_store %arg8[%c0_1, %c0_2], %1 {strides = array<i32>} : memref<16x2304xbf16, #tpu.memory_space<vmem>>, vector<16x2244xbf16>,
    %cst = arith.constant 0.000000e+00 : bf16
    %3 = vector.broadcast %cst : bf16 to vector<16x60xbf16>
    %c0_3 = arith.constant 0 : index
    %c2244 = arith.constant 2244 : index
    %4 = vector.load %arg8[%c0_3, %c2244] : memref<16x2304xbf16, #tpu.memory_space<vmem>>, vector<16x60xbf16>
    tpu.vector_store %arg8[%c0_3, %c2244], %3 {strides = array<i32>} : memref<16x2304xbf16, #tpu.memory_space<vmem>>, vector<16x60xbf16>,
    %c0_4 = arith.constant 0 : index
    %c0_5 = arith.constant 0 : index
    %5 = vector.load %arg2[%c0_4, %c0_5] : memref<2304x128xi8, #tpu.memory_space<vmem>>, vector<2304x128xi8>
    %c0_6 = arith.constant 0 : index
    %c0_7 = arith.constant 0 : index
    %6 = vector.load %arg3[%c0_6, %c0_7] : memref<1x128xf32, #tpu.memory_space<vmem>>, vector<1x128xf32>
    %7 = arith.sitofp %5 : vector<2304x128xi8> to vector<2304x128xf32>
    %8 = vector.broadcast %6 : vector<1x128xf32> to vector<2304x128xf32>
    %9 = arith.mulf %7, %8 : vector<2304x128xf32>
    %10 = arith.truncf %9 : vector<2304x128xf32> to vector<2304x128xbf16>
    %c0_8 = arith.constant 0 : index
    %c0_9 = arith.constant 0 : index
    %11 = vector.load %arg8[%c0_8, %c0_9] : memref<16x2304xbf16, #tpu.memory_space<vmem>>, vector<16x2304xbf16>
    %cst_10 = arith.constant dense<0.000000e+00> : vector<16x128xf32>
    %12 = tpu.matmul %11, %10, %cst_10 {dimension_numbers = #tpu.dot_dimension_numbers<[1], [0], [0], [1], [0, 0, 1, 1], [], []>} : vector<16x2304xbf16>, vector<2304x128xbf16>, vector<16x128xf32> -> vector<16x128xf32>
    %c0_11 = arith.constant 0 : index
    %c0_12 = arith.constant 0 : index
    %13 = vector.load %arg4[%c0_11, %c0_12] : memref<1x128xf32, #tpu.memory_space<vmem>>, vector<1x128xf32>
    %14 = vector.broadcast %13 : vector<1x128xf32> to vector<16x128xf32>
    %15 = arith.addf %12, %14 : vector<16x128xf32>
    %cst_13 = arith.constant -2.14748365E+9 : f32
    %16 = vector.broadcast %cst_13 : f32 to vector<16x128xf32>
    %17 = arith.cmpf ole, %15, %16 : vector<16x128xf32>
    %cst_14 = arith.constant 0.000000e+00 : f32
    %18 = vector.broadcast %cst_14 : f32 to vector<16x128xf32>
    %19 = arith.select %17, %18, %15 : vector<16x128xi1>, vector<16x128xf32>
    %cst_15 = arith.constant -2.14748365E+9 : f32
    %20 = vector.broadcast %cst_15 : f32 to vector<16x128xf32>
    %21 = arith.cmpf oge, %19, %20 : vector<16x128xf32>
    %cst_16 = arith.constant 1.000000e+00 : f32
    %22 = vector.broadcast %cst_16 : f32 to vector<16x128xf32>
    %23 = arith.select %21, %22, %19 : vector<16x128xi1>, vector<16x128xf32>
    %24 = arith.truncf %23 : vector<16x128xf32> to vector<16x128xbf16>
    %c0_17 = arith.constant 0 : index
    %c0_18 = arith.constant 0 : index
    %25 = vector.load %arg5[%c0_17, %c0_18] : memref<128x128xbf16, #tpu.memory_space<vmem>>, vector<128x128xbf16>
    %cst_19 = arith.constant dense<0.000000e+00> : vector<16x128xf32>
    %26 = tpu.matmul %24, %25, %cst_19 {dimension_numbers = #tpu.dot_dimension_numbers<[1], [0], [0], [1], [0, 0, 1, 1], [], []>} : vector<16x128xbf16>, vector<128x128xbf16>, vector<16x128xf32> -> vector<16x128xf32>
    %c0_20 = arith.constant 0 : index
    %c0_21 = arith.constant 0 : index
    %27 = vector.load %arg6[%c0_20, %c0_21] : memref<1x128xf32, #tpu.memory_space<vmem>>, vector<1x128xf32>
    %28 = vector.broadcast %27 : vector<1x128xf32> to vector<16x128xf32>
    %29 = arith.addf %26, %28 : vector<16x128xf32>
    %cst_22 = arith.constant -2.14748365E+9 : f32
    %30 = vector.broadcast %cst_22 : f32 to vector<16x128xf32>
    %31 = arith.cmpf ole, %29, %30 : vector<16x128xf32>
    %cst_23 = arith.constant 0.000000e+00 : f32
    %32 = vector.broadcast %cst_23 : f32 to vector<16x128xf32>
    %33 = arith.select %31, %32, %29 : vector<16x128xi1>, vector<16x128xf32>
    %cst_24 = arith.constant -2.14748365E+9 : f32
    %34 = vector.broadcast %cst_24 : f32 to vector<16x128xf32>
    %35 = arith.cmpf oge, %33, %34 : vector<16x128xf32>
    %cst_25 = arith.constant 1.000000e+00 : f32
    %36 = vector.broadcast %cst_25 : f32 to vector<16x128xf32>
    %37 = arith.select %35, %36, %33 : vector<16x128xi1>, vector<16x128xf32>
    %c0_26 = arith.constant 0 : index
    %c0_27 = arith.constant 0 : index
    %38 = vector.load %arg7[%c0_26, %c0_27] : memref<16x128xf32, #tpu.memory_space<vmem>>, vector<16x128xf32>
    tpu.vector_store %arg7[%c0_26, %c0_27], %37 {strides = array<i32>} : memref<16x128xf32, #tpu.memory_space<vmem>>, vector<16x128xf32>,
    return
  }
  func.func @transform_0(%arg0: i32) -> (i32, i32) {
    %c0_i32 = arith.constant 0 : i32
    %c0_i32_0 = arith.constant 0 : i32
    return %arg0, %c0_i32 : i32, i32
  }
  func.func @transform_1(%arg0: i32) -> (i32, i32) {
    %c0_i32 = arith.constant 0 : i32
    %c0_i32_0 = arith.constant 0 : i32
    %c0_i32_1 = arith.constant 0 : i32
    return %c0_i32, %c0_i32_0 : i32, i32
  }
  func.func @transform_2(%arg0: i32) -> (i32, i32) {
    %c0_i32 = arith.constant 0 : i32
    %c0_i32_0 = arith.constant 0 : i32
    %c0_i32_1 = arith.constant 0 : i32
    return %c0_i32, %c0_i32_0 : i32, i32
  }
  func.func @transform_3(%arg0: i32) -> (i32, i32) {
    %c0_i32 = arith.constant 0 : i32
    %c0_i32_0 = arith.constant 0 : i32
    %c0_i32_1 = arith.constant 0 : i32
    return %c0_i32, %c0_i32_0 : i32, i32
  }
  func.func @transform_4(%arg0: i32) -> (i32, i32) {
    %c0_i32 = arith.constant 0 : i32
    %c0_i32_0 = arith.constant 0 : i32
    %c0_i32_1 = arith.constant 0 : i32
    return %c0_i32, %c0_i32_0 : i32, i32
  }
  func.func @transform_5(%arg0: i32) -> (i32, i32) {
    %c0_i32 = arith.constant 0 : i32
    %c0_i32_0 = arith.constant 0 : i32
    %c0_i32_1 = arith.constant 0 : i32
    return %c0_i32, %c0_i32_0 : i32, i32
  }
  func.func @transform_6(%arg0: i32) -> (i32, i32) {
    %c0_i32 = arith.constant 0 : i32
    %c0_i32_0 = arith.constant 0 : i32
    return %arg0, %c0_i32 : i32, i32
  }
}

</mosaic_0001>

<llo_original>
// kernel: net_plain_forward.1
$region0: #{net_plain_forward.1}
  #allocation0 [shape = 'u32[]', space=smem, size = 0x4, offset = 0x4, fixed_abs, tag = 'smem constant byte address 0x4 - core index']
  #allocation1 [shape = 'u32[144,128]{1,0:T(1,128)}', space=vmem, size = 0x12000, scoped, tag = 'internal scratch']
  #allocation2 [shape = 'bf16[16,2304]{1,0:T(16,128)(2,1)}', space=vmem, size = 0x12000, scoped, tag = 'scratch operand']
  %s0 = inlined_call_operand.vmem [shape: f32[16,2244], index: 0, kind: input, shape index: {}]
  %s1 = inlined_call_operand.vmem [shape: s8[2304,128], index: 1, kind: input, shape index: {}]
  %s2 = inlined_call_operand.vmem [shape: f32[1,128], index: 2, kind: input, shape index: {}]
  %s3 = inlined_call_operand.vmem [shape: f32[1,128], index: 3, kind: input, shape index: {}]
  %s4 = inlined_call_operand.hbm [shape: bf16[128,128], index: 4, kind: input, shape index: {}]
  %s5 = inlined_call_operand.vmem [shape: f32[1,128], index: 5, kind: input, shape index: {}]
  %s6 = inlined_call_operand.hbm [shape: f32[16,128], index: 6, kind: output, shape index: {}]
  %s7 = sld [smem:[#allocation0]]
  $region38: #{net_plain_forward.1} parent=0
    _
  %s9 = ssub.s32 1, %s7
  %s10 = scalar_select 0, %s9, %s7
  $region1: #{net_plain_forward.1} parent=0
    #allocation3 [shape = 'u8[32768]{0}', space=vmem, size = 0x8000, scoped, tag = 'input window, operand 4, single buffered']
    #allocation4 [shape = 's32[1]{0}', space=sflag, size = 0x4, scoped, tag = 'scoped memory for net_plain_forward.1']
    #allocation5 [shape = 's32[1]{0}', space=sflag, size = 0x4, scoped, tag = 'scoped memory for net_plain_forward.1']
    #allocation6 [shape = 'u8[8192]{0}', space=vmem, size = 0x2000, scoped, tag = 'output window, operand 0, single buffered']
    %11 = vsyncpa [#allocation4], 0
    %12 = vsyncpa [#allocation5], 0
    // Predicated region
    $region2: #{net_plain_forward.1} parent=1 // pred_check
      _
    $region3: #{net_plain_forward.1} parent=1 // pred_check_branch
      %14 = sbr.rel (0) target = $region5
    $region4: #{net_plain_forward.1} parent=1 // pred_region
      _
    $region5: #{net_plain_forward.1} parent=1 // pred_fallthru
      _
    // Predicated region
    $region6: #{net_plain_forward.1} parent=1 // pred_check
      _
    $region7: #{net_plain_forward.1} parent=1 // pred_check_branch
      %16 = sbr.rel (0) target = $region9
    $region8: #{net_plain_forward.1} parent=1 // pred_region
      _
    $region9: #{net_plain_forward.1} parent=1 // pred_fallthru
      _
    // Predicated region
    $region10: #{net_plain_forward.1} parent=1 // pred_check
      _
    $region11: #{net_plain_forward.1} parent=1 // pred_check_branch
      %18 = sbr.rel (0) target = $region13
    $region12: #{net_plain_forward.1} parent=1 // pred_region
      _
    $region13: #{net_plain_forward.1} parent=1 // pred_fallthru
      _
    // Predicated region
    $region14: #{net_plain_forward.1} parent=1 // pred_check
      _
    $region15: #{net_plain_forward.1} parent=1 // pred_check_branch
      %20 = sbr.rel (0) target = $region17
    $region16: #{net_plain_forward.1} parent=1 // pred_region
      _
    $region17: #{net_plain_forward.1} parent=1 // pred_fallthru
      _
    // Predicated region
    $region18: #{net_plain_forward.1} parent=1 // pred_check
      _
    $region19: #{net_plain_forward.1} parent=1 // pred_check_branch
      %22 = sbr.rel (0) target = $region21
    $region20: #{net_plain_forward.1} parent=1 // pred_region
      %s24 = ssub.s32 1024, 1024
      %25 = vsyncadd [#allocation4], %s24
      %s26 = sshll.u32 [#allocation3], 4
      %s27 = int_to_ptr.vmem [resolvable:$true] %s26
      %32 = dma.hbm_to_vmem [thread:$0]  %s4, 1024, %s27, [#allocation4], 64, 64, 4
    $region21: #{net_plain_forward.1} parent=1 // pred_fallthru
      _
    // Predicated region
    $region22: #{net_plain_forward.1} parent=1 // pred_check
      _
    $region23: #{net_plain_forward.1} parent=1 // pred_check_branch
      %34 = sbr.rel (0) target = $region25
    $region24: #{net_plain_forward.1} parent=1 // pred_region
      _
    $region25: #{net_plain_forward.1} parent=1 // pred_fallthru
      _
    // Predicated region
    $region26: #{net_plain_forward.1} parent=1 // pred_check
      _
    $region27: #{net_plain_forward.1} parent=1 // pred_check_branch
      %36 = sbr.rel (0) target = $region29
    $region28: #{net_plain_forward.1} parent=1 // pred_region
      %37 = dma.done [#allocation4], 1024
    $region29: #{net_plain_forward.1} parent=1 // pred_fallthru
      _
    %v39 = vld [vmem:[%s0] sm:$0xff]
    %v40 = vld [vmem:[%s0 + $0x8] sm:$0xff]
    %v41 = vld [vmem:[%s0 + $0x10] sm:$0xff]
    %v42 = vld [vmem:[%s0 + $0x18] sm:$0xff]
    %v43 = vld [vmem:[%s0 + $0x20] sm:$0xff]
    %v44 = vld [vmem:[%s0 + $0x28] sm:$0xff]
    %v45 = vld [vmem:[%s0 + $0x30] sm:$0xff]
    %v46 = vld [vmem:[%s0 + $0x38] sm:$0xff]
    %v47 = vld [vmem:[%s0 + $0x40] sm:$0xff]
    %v48 = vld [vmem:[%s0 + $0x48] sm:$0xff]
    %v49 = vld [vmem:[%s0 + $0x50] sm:$0xff]
    %v50 = vld [vmem:[%s0 + $0x58] sm:$0xff]
    %v51 = vld [vmem:[%s0 + $0x60] sm:$0xff]
    %v52 = vld [vmem:[%s0 + $0x68] sm:$0xff]
    %v53 = vld [vmem:[%s0 + $0x70] sm:$0xff]
    %v54 = vld [vmem:[%s0 + $0x78] sm:$0xff]
    %v55 = vld [vmem:[%s0 + $0x80] sm:$0xff]
    %v56 = vld [vmem:[%s0 + $0x88] sm:$0xff]
    %v57 = vld [vmem:[%s0 + $0x90] sm:$0xff]
    %v58 = vld [vmem:[%s0 + $0x98] sm:$0xff]
    %v59 = vld [vmem:[%s0 + $0xa0] sm:$0xff]
    %v60 = vld [vmem:[%s0 + $0xa8] sm:$0xff]
    %v61 = vld [vmem:[%s0 + $0xb0] sm:$0xff]
    %v62 = vld [vmem:[%s0 + $0xb8] sm:$0xff]
    %v63 = vld [vmem:[%s0 + $0xc0] sm:$0xff]
    %v64 = vld [vmem:[%s0 + $0xc8] sm:$0xff]
    %v65 = vld [vmem:[%s0 + $0xd0] sm:$0xff]
    %v66 = vld [vmem:[%s0 + $0xd8] sm:$0xff]
    %v67 = vld [vmem:[%s0 + $0xe0] sm:$0xff]
    %v68 = vld [vmem:[%s0 + $0xe8] sm:$0xff]
    %v69 = vld [vmem:[%s0 + $0xf0] sm:$0xff]
    %v70 = vld [vmem:[%s0 + $0xf8] sm:$0xff]
    %v71 = vld [vmem:[%s0 + $0x100] sm:$0xff]
    %v72 = vld [vmem:[%s0 + $0x108] sm:$0xff]
    %v73 = vld [vmem:[%s0 + $0x110] sm:$0xff]
    %v74 = vld [vmem:[%s0 + $0x118] sm:$0xff]
    %v75 = vpack.c.bf16 %v57, %v39
    %v76 = vpack.c.bf16 %v58, %v40
    %v77 = vpack.c.bf16 %v59, %v41
    %v78 = vpack.c.bf16 %v60, %v42
    %v79 = vpack.c.bf16 %v61, %v43
    %v80 = vpack.c.bf16 %v62, %v44
    %v81 = vpack.c.bf16 %v63, %v45
    %v82 = vpack.c.bf16 %v64, %v46
    %v83 = vpack.c.bf16 %v65, %v47
    %v84 = vpack.c.bf16 %v66, %v48
    %v85 = vpack.c.bf16 %v67, %v49
    %v86 = vpack.c.bf16 %v68, %v50
    %v87 = vpack.c.bf16 %v69, %v51
    %v88 = vpack.c.bf16 %v70, %v52
    %v89 = vpack.c.bf16 %v71, %v53
    %v90 = vpack.c.bf16 %v72, %v54
    %v91 = vpack.c.bf16 %v73, %v55
    %v92 = vpack.c.bf16 %v74, %v56
    %93 = vst [vmem:[#allocation2] sm:$0xff] %v75
    %94 = vst [vmem:[#allocation2 + $0x8] sm:$0xff] %v76
    %95 = vst [vmem:[#allocation2 + $0x10] sm:$0xff] %v77
    %96 = vst [vmem:[#allocation2 + $0x18] sm:$0xff] %v78
    %97 = vst [vmem:[#allocation2 + $0x20] sm:$0xff] %v79
    %98 = vst [vmem:[#allocation2 + $0x28] sm:$0xff] %v80
    %99 = vst [vmem:[#allocation2 + $0x30] sm:$0xff] %v81
    %100 = vst [vmem:[#allocation2 + $0x38] sm:$0xff] %v82
    %101 = vst [vmem:[#allocation2 + $0x40] sm:$0xff] %v83
    %102 = vst [vmem:[#allocation2 + $0x48] sm:$0xff] %v84
    %103 = vst [vmem:[#allocation2 + $0x50] sm:$0xff] %v85
    %104 = vst [vmem:[#allocation2 + $0x58] sm:$0xff] %v86
    %105 = vst [vmem:[#allocation2 + $0x60] sm:$0xff] %v87
    %106 = vst [vmem:[#allocation2 + $0x68] sm:$0xff] %v88
    %107 = vst [vmem:[#allocation2 + $0x70] sm:$0xff] %v89
    %108 = vst [vmem:[#allocation2 + $0x78] sm:$0xff] %v90
    %109 = vst [vmem:[#allocation2 + $0x80] sm:$0xff] %v91
    %vm110 = vcmask 556032
    %111 = vst.msk [vmem:[#allocation2 + $0x88] sm:$0xff] %vm110, %v92
    %vm112 = vcmask 1048096
    %113 = vst.msk [vmem:[#allocation2 + $0x88] sm:$0xff] %vm112, 0
    %v114 = vld [vmem:[%s1] sm:$0xff]
    %v115 = vld [vmem:[%s1 + $0x8] sm:$0xff]
    %v116 = vld [vmem:[%s1 + $0x10] sm:$0xff]
    %v117 = vld [vmem:[%s1 + $0x18] sm:$0xff]
    %v118 = vld [vmem:[%s1 + $0x20] sm:$0xff]
    %v119 = vld [vmem:[%s1 + $0x28] sm:$0xff]
    %v120 = vld [vmem:[%s1 + $0x30] sm:$0xff]
    %v121 = vld [vmem:[%s1 + $0x38] sm:$0xff]
    %v122 = vld [vmem:[%s1 + $0x40] sm:$0xff]
    %v123 = vld [vmem:[%s1 + $0x48] sm:$0xff]
    %v124 = vld [vmem:[%s1 + $0x50] sm:$0xff]
    %v125 = vld [vmem:[%s1 + $0x58] sm:$0xff]
    %v126 = vld [vmem:[%s1 + $0x60] sm:$0xff]
    %v127 = vld [vmem:[%s1 + $0x68] sm:$0xff]
    %v128 = vld [vmem:[%s1 + $0x70] sm:$0xff]
    %v129 = vld [vmem:[%s1 + $0x78] sm:$0xff]
    %v130 = vld [vmem:[%s1 + $0x80] sm:$0xff]
    %v131 = vld [vmem:[%s1 + $0x88] sm:$0xff]
    %v132 = vld [vmem:[%s1 + $0x90] sm:$0xff]
    %v133 = vld [vmem:[%s1 + $0x98] sm:$0xff]
    %v134 = vld [vmem:[%s1 + $0xa0] sm:$0xff]
    %v135 = vld [vmem:[%s1 + $0xa8] sm:$0xff]
    %v136 = vld [vmem:[%s1 + $0xb0] sm:$0xff]
    %v137 = vld [vmem:[%s1 + $0xb8] sm:$0xff]
    %v138 = vld [vmem:[%s1 + $0xc0] sm:$0xff]
    %v139 = vld [vmem:[%s1 + $0xc8] sm:$0xff]
    %v140 = vld [vmem:[%s1 + $0xd0] sm:$0xff]
    %v141 = vld [vmem:[%s1 + $0xd8] sm:$0xff]
    %v142 = vld [vmem:[%s1 + $0xe0] sm:$0xff]
    %v143 = vld [vmem:[%s1 + $0xe8] sm:$0xff]
    %v144 = vld [vmem:[%s1 + $0xf0] sm:$0xff]
    %v145 = vld [vmem:[%s1 + $0xf8] sm:$0xff]
    %v146 = vld [vmem:[%s1 + $0x100] sm:$0xff]
    %v147 = vld [vmem:[%s1 + $0x108] sm:$0xff]
    %v148 = vld [vmem:[%s1 + $0x110] sm:$0xff]
    %v149 = vld [vmem:[%s1 + $0x118] sm:$0xff]
    %v150 = vld [vmem:[%s1 + $0x120] sm:$0xff]
    %v151 = vld [vmem:[%s1 + $0x128] sm:$0xff]
    %v152 = vld [vmem:[%s1 + $0x130] sm:$0xff]
    %v153 = vld [vmem:[%s1 + $0x138] sm:$0xff]
    %v154 = vld [vmem:[%s1 + $0x140] sm:$0xff]
    %v155 = vld [vmem:[%s1 + $0x148] sm:$0xff]
    %v156 = vld [vmem:[%s1 + $0x150] sm:$0xff]
    %v157 = vld [vmem:[%s1 + $0x158] sm:$0xff]
    %v158 = vld [vmem:[%s1 + $0x160] sm:$0xff]
    %v159 = vld [vmem:[%s1 + $0x168] sm:$0xff]
    %v160 = vld [vmem:[%s1 + $0x170] sm:$0xff]
    %v161 = vld [vmem:[%s1 + $0x178] sm:$0xff]
    %v162 = vld [vmem:[%s1 + $0x180] sm:$0xff]
    %v163 = vld [vmem:[%s1 + $0x188] sm:$0xff]
    %v164 = vld [vmem:[%s1 + $0x190] sm:$0xff]
    %v165 = vld [vmem:[%s1 + $0x198] sm:$0xff]
    %v166 = vld [vmem:[%s1 + $0x1a0] sm:$0xff]
    %v167 = vld [vmem:[%s1 + $0x1a8] sm:$0xff]
    %v168 = vld [vmem:[%s1 + $0x1b0] sm:$0xff]
    %v169 = vld [vmem:[%s1 + $0x1b8] sm:$0xff]
    %v170 = vld [vmem:[%s1 + $0x1c0] sm:$0xff]
    %v171 = vld [vmem:[%s1 + $0x1c8] sm:$0xff]
    %v172 = vld [vmem:[%s1 + $0x1d0] sm:$0xff]
    %v173 = vld [vmem:[%s1 + $0x1d8] sm:$0xff]
    %v174 = vld [vmem:[%s1 + $0x1e0] sm:$0xff]
    %v175 = vld [vmem:[%s1 + $0x1e8] sm:$0xff]
    %v176 = vld [vmem:[%s1 + $0x1f0] sm:$0xff]
    %v177 = vld [vmem:[%s1 + $0x1f8] sm:$0xff]
    %v178 = vld [vmem:[%s1 + $0x200] sm:$0xff]
    %v179 = vld [vmem:[%s1 + $0x208] sm:$0xff]
    %v180 = vld [vmem:[%s1 + $0x210] sm:$0xff]
    %v181 = vld [vmem:[%s1 + $0x218] sm:$0xff]
    %v182 = vld [vmem:[%s1 + $0x220] sm:$0xff]
    %v183 = vld [vmem:[%s1 + $0x228] sm:$0xff]
    %v184 = vld [vmem:[%s1 + $0x230] sm:$0xff]
    %v185 = vld [vmem:[%s1 + $0x238] sm:$0xff]
    %v186 = vld [vmem:[%s2] sm:$0x1]
    %v187 = vunpack.c.0.s8 %v114
    %v188 = vunpack.c.1.s8 %v114
    %v189 = vunpack.c.2.s8 %v114
    %v190 = vunpack.c.3.s8 %v114
    %v191 = vunpack.c.0.s8 %v115
    %v192 = vunpack.c.1.s8 %v115
    %v193 = vunpack.c.2.s8 %v115
    %v194 = vunpack.c.3.s8 %v115
    %v195 = vunpack.c.0.s8 %v116
    %v196 = vunpack.c.1.s8 %v116
    %v197 = vunpack.c.2.s8 %v116
    %v198 = vunpack.c.3.s8 %v116
    %v199 = vunpack.c.0.s8 %v117
    %v200 = vunpack.c.1.s8 %v117
    %v201 = vunpack.c.2.s8 %v117
    %v202 = vunpack.c.3.s8 %v117
    %v203 = vunpack.c.0.s8 %v118
    %v204 = vunpack.c.1.s8 %v118
    %v205 = vunpack.c.2.s8 %v118
    %v206 = vunpack.c.3.s8 %v118
    %v207 = vunpack.c.0.s8 %v119
    %v208 = vunpack.c.1.s8 %v119
    %v209 = vunpack.c.2.s8 %v119
    %v210 = vunpack.c.3.s8 %v119
    %v211 = vunpack.c.0.s8 %v120
    %v212 = vunpack.c.1.s8 %v120
    %v213 = vunpack.c.2.s8 %v120
    %v214 = vunpack.c.3.s8 %v120
    %v215 = vunpack.c.0.s8 %v121
    %v216 = vunpack.c.1.s8 %v121
    %v217 = vunpack.c.2.s8 %v121
    %v218 = vunpack.c.3.s8 %v121
    %v219 = vunpack.c.0.s8 %v122
    %v220 = vunpack.c.1.s8 %v122
    %v221 = vunpack.c.2.s8 %v122
    %v222 = vunpack.c.3.s8 %v122
    %v223 = vunpack.c.0.s8 %v123
    %v224 = vunpack.c.1.s8 %v123
    %v225 = vunpack.c.2.s8 %v123
    %v226 = vunpack.c.3.s8 %v123
    %v227 = vunpack.c.0.s8 %v124
    %v228 = vunpack.c.1.s8 %v124
    %v229 = vunpack.c.2.s8 %v124
    %v230 = vunpack.c.3.s8 %v124
    %v231 = vunpack.c.0.s8 %v125
    %v232 = vunpack.c.1.s8 %v125
    %v233 = vunpack.c.2.s8 %v125
    %v234 = vunpack.c.3.s8 %v125
    %v235 = vunpack.c.0.s8 %v126
    %v236 = vunpack.c.1.s8 %v126
    %v237 = vunpack.c.2.s8 %v126
    %v238 = vunpack.c.3.s8 %v126
    %v239 = vunpack.c.0.s8 %v127
    %v240 = vunpack.c.1.s8 %v127
    %v241 = vunpack.c.2.s8 %v127
    %v242 = vunpack.c.3.s8 %v127
    %v243 = vunpack.c.0.s8 %v128
    %v244 = vunpack.c.1.s8 %v128
    %v245 = vunpack.c.2.s8 %v128
    %v246 = vunpack.c.3.s8 %v128
    %v247 = vunpack.c.0.s8 %v129
    %v248 = vunpack.c.1.s8 %v129
    %v249 = vunpack.c.2.s8 %v129
    %v250 = vunpack.c.3.s8 %v129
    %v251 = vunpack.c.0.s8 %v130
    %v252 = vunpack.c.1.s8 %v130
    %v253 = vunpack.c.2.s8 %v130
    %v254 = vunpack.c.3.s8 %v130
    %v255 = vunpack.c.0.s8 %v131
    %v256 = vunpack.c.1.s8 %v131
    %v257 = vunpack.c.2.s8 %v131
    %v258 = vunpack.c.3.s8 %v131
    %v259 = vunpack.c.0.s8 %v132
    %v260 = vunpack.c.1.s8 %v132
    %v261 = vunpack.c.2.s8 %v132
    %v262 = vunpack.c.3.s8 %v132
    %v263 = vunpack.c.0.s8 %v133
    %v264 = vunpack.c.1.s8 %v133
    %v265 = vunpack.c.2.s8 %v133
    %v266 = vunpack.c.3.s8 %v133
    %v267 = vunpack.c.0.s8 %v134
    %v268 = vunpack.c.1.s8 %v134
    %v269 = vunpack.c.2.s8 %v134
    %v270 = vunpack.c.3.s8 %v134
    %v271 = vunpack.c.0.s8 %v135
    %v272 = vunpack.c.1.s8 %v135
    %v273 = vunpack.c.2.s8 %v135
    %v274 = vunpack.c.3.s8 %v135
    %v275 = vunpack.c.0.s8 %v136
    %v276 = vunpack.c.1.s8 %v136
    %v277 = vunpack.c.2.s8 %v136
    %v278 = vunpack.c.3.s8 %v136
    %v279 = vunpack.c.0.s8 %v137
    %v280 = vunpack.c.1.s8 %v137
    %v281 = vunpack.c.2.s8 %v137
    %v282 = vunpack.c.3.s8 %v137
    %v283 = vunpack.c.0.s8 %v138
    %v284 = vunpack.c.1.s8 %v138
    %v285 = vunpack.c.2.s8 %v138
    %v286 = vunpack.c.3.s8 %v138
    %v287 = vunpack.c.0.s8 %v139
    %v288 = vunpack.c.1.s8 %v139
    %v289 = vunpack.c.2.s8 %v139
    %v290 = vunpack.c.3.s8 %v139
    %v291 = vunpack.c.0.s8 %v140
    %v292 = vunpack.c.1.s8 %v140
    %v293 = vunpack.c.2.s8 %v140
    %v294 = vunpack.c.3.s8 %v140
    %v295 = vunpack.c.0.s8 %v141
    %v296 = vunpack.c.1.s8 %v141
    %v297 = vunpack.c.2.s8 %v141
    %v298 = vunpack.c.3.s8 %v141
    %v299 = vunpack.c.0.s8 %v142
    %v300 = vunpack.c.1.s8 %v142
    %v301 = vunpack.c.2.s8 %v142
    %v302 = vunpack.c.3.s8 %v142
    %v303 = vunpack.c.0.s8 %v143
    %v304 = vunpack.c.1.s8 %v143
    %v305 = vunpack.c.2.s8 %v143
    %v306 = vunpack.c.3.s8 %v143
    %v307 = vunpack.c.0.s8 %v144
    %v308 = vunpack.c.1.s8 %v144
    %v309 = vunpack.c.2.s8 %v144
    %v310 = vunpack.c.3.s8 %v144
    %v311 = vunpack.c.0.s8 %v145
    %v312 = vunpack.c.1.s8 %v145
    %v313 = vunpack.c.2.s8 %v145
    %v314 = vunpack.c.3.s8 %v145
    %v315 = vunpack.c.0.s8 %v146
    %v316 = vunpack.c.1.s8 %v146
    %v317 = vunpack.c.2.s8 %v146
    %v318 = vunpack.c.3.s8 %v146
    %v319 = vunpack.c.0.s8 %v147
    %v320 = vunpack.c.1.s8 %v147
    %v321 = vunpack.c.2.s8 %v147
    %v322 = vunpack.c.3.s8 %v147
    %v323 = vunpack.c.0.s8 %v148
    %v324 = vunpack.c.1.s8 %v148
    %v325 = vunpack.c.2.s8 %v148
    %v326 = vunpack.c.3.s8 %v148
    %v327 = vunpack.c.0.s8 %v149
    %v328 = vunpack.c.1.s8 %v149
    %v329 = vunpack.c.2.s8 %v149
    %v330 = vunpack.c.3.s8 %v149
    %v331 = vunpack.c.0.s8 %v150
    %v332 = vunpack.c.1.s8 %v150
    %v333 = vunpack.c.2.s8 %v150
    %v334 = vunpack.c.3.s8 %v150
    %v335 = vunpack.c.0.s8 %v151
    %v336 = vunpack.c.1.s8 %v151
    %v337 = vunpack.c.2.s8 %v151
    %v338 = vunpack.c.3.s8 %v151
    %v339 = vunpack.c.0.s8 %v152
    %v340 = vunpack.c.1.s8 %v152
    %v341 = vunpack.c.2.s8 %v152
    %v342 = vunpack.c.3.s8 %v152
    %v343 = vunpack.c.0.s8 %v153
    %v344 = vunpack.c.1.s8 %v153
    %v345 = vunpack.c.2.s8 %v153
    %v346 = vunpack.c.3.s8 %v153
    %v347 = vunpack.c.0.s8 %v154
    %v348 = vunpack.c.1.s8 %v154
    %v349 = vunpack.c.2.s8 %v154
    %v350 = vunpack.c.3.s8 %v154
    %v351 = vunpack.c.0.s8 %v155
    %v352 = vunpack.c.1.s8 %v155
    %v353 = vunpack.c.2.s8 %v155
    %v354 = vunpack.c.3.s8 %v155
    %v355 = vunpack.c.0.s8 %v156
    %v356 = vunpack.c.1.s8 %v156
    %v357 = vunpack.c.2.s8 %v156
    %v358 = vunpack.c.3.s8 %v156
    %v359 = vunpack.c.0.s8 %v157
    %v360 = vunpack.c.1.s8 %v157
    %v361 = vunpack.c.2.s8 %v157
    %v362 = vunpack.c.3.s8 %v157
    %v363 = vunpack.c.0.s8 %v158
    %v364 = vunpack.c.1.s8 %v158
    %v365 = vunpack.c.2.s8 %v158
    %v366 = vunpack.c.3.s8 %v158
    %v367 = vunpack.c.0.s8 %v159
    %v368 = vunpack.c.1.s8 %v159
    %v369 = vunpack.c.2.s8 %v159
    %v370 = vunpack.c.3.s8 %v159
    %v371 = vunpack.c.0.s8 %v160
    %v372 = vunpack.c.1.s8 %v160
    %v373 = vunpack.c.2.s8 %v160
    %v374 = vunpack.c.3.s8 %v160
    %v375 = vunpack.c.0.s8 %v161
    %v376 = vunpack.c.1.s8 %v161
    %v377 = vunpack.c.2.s8 %v161
    %v378 = vunpack.c.3.s8 %v161
    %v379 = vunpack.c.0.s8 %v162
    %v380 = vunpack.c.1.s8 %v162
    %v381 = vunpack.c.2.s8 %v162
    %v382 = vunpack.c.3.s8 %v162
    %v383 = vunpack.c.0.s8 %v163
    %v384 = vunpack.c.1.s8 %v163
    %v385 = vunpack.c.2.s8 %v163
    %v386 = vunpack.c.3.s8 %v163
    %v387 = vunpack.c.0.s8 %v164
    %v388 = vunpack.c.1.s8 %v164
    %v389 = vunpack.c.2.s8 %v164
    %v390 = vunpack.c.3.s8 %v164
    %v391 = vunpack.c.0.s8 %v165
    %v392 = vunpack.c.1.s8 %v165
    %v393 = vunpack.c.2.s8 %v165
    %v394 = vunpack.c.3.s8 %v165
    %v395 = vunpack.c.0.s8 %v166
    %v396 = vunpack.c.1.s8 %v166
    %v397 = vunpack.c.2.s8 %v166
    %v398 = vunpack.c.3.s8 %v166
    %v399 = vunpack.c.0.s8 %v167
    %v400 = vunpack.c.1.s8 %v167
    %v401 = vunpack.c.2.s8 %v167
    %v402 = vunpack.c.3.s8 %v167
    %v403 = vunpack.c.0.s8 %v168
    %v404 = vunpack.c.1.s8 %v168
    %v405 = vunpack.c.2.s8 %v168
    %v406 = vunpack.c.3.s8 %v168
    %v407 = vunpack.c.0.s8 %v169
    %v408 = vunpack.c.1.s8 %v169
    %v409 = vunpack.c.2.s8 %v169
    %v410 = vunpack.c.3.s8 %v169
    %v411 = vunpack.c.0.s8 %v170
    %v412 = vunpack.c.1.s8 %v170
    %v413 = vunpack.c.2.s8 %v170
    %v414 = vunpack.c.3.s8 %v170
    %v415 = vunpack.c.0.s8 %v171
    %v416 = vunpack.c.1.s8 %v171
    %v417 = vunpack.c.2.s8 %v171
    %v418 = vunpack.c.3.s8 %v171
    %v419 = vunpack.c.0.s8 %v172
    %v420 = vunpack.c.1.s8 %v172
    %v421 = vunpack.c.2.s8 %v172
    %v422 = vunpack.c.3.s8 %v172
    %v423 = vunpack.c.0.s8 %v173
    %v424 = vunpack.c.1.s8 %v173
    %v425 = vunpack.c.2.s8 %v173
    %v426 = vunpack.c.3.s8 %v173
    %v427 = vunpack.c.0.s8 %v174
    %v428 = vunpack.c.1.s8 %v174
    %v429 = vunpack.c.2.s8 %v174
    %v430 = vunpack.c.3.s8 %v174
    %v431 = vunpack.c.0.s8 %v175
    %v432 = vunpack.c.1.s8 %v175
    %v433 = vunpack.c.2.s8 %v175
    %v434 = vunpack.c.3.s8 %v175
    %v435 = vunpack.c.0.s8 %v176
    %v436 = vunpack.c.1.s8 %v176
    %v437 = vunpack.c.2.s8 %v176
    %v438 = vunpack.c.3.s8 %v176
    %v439 = vunpack.c.0.s8 %v177
    %v440 = vunpack.c.1.s8 %v177
    %v441 = vunpack.c.2.s8 %v177
    %v442 = vunpack.c.3.s8 %v177
    %v443 = vunpack.c.0.s8 %v178
    %v444 = vunpack.c.1.s8 %v178
    %v445 = vunpack.c.2.s8 %v178
    %v446 = vunpack.c.3.s8 %v178
    %v447 = vunpack.c.0.s8 %v179
    %v448 = vunpack.c.1.s8 %v179
    %v449 = vunpack.c.2.s8 %v179
    %v450 = vunpack.c.3.s8 %v179
    %v451 = vunpack.c.0.s8 %v180
    %v452 = vunpack.c.1.s8 %v180
    %v453 = vunpack.c.2.s8 %v180
    %v454 = vunpack.c.3.s8 %v180
    %v455 = vunpack.c.0.s8 %v181
    %v456 = vunpack.c.1.s8 %v181
    %v457 = vunpack.c.2.s8 %v181
    %v458 = vunpack.c.3.s8 %v181
    %v459 = vunpack.c.0.s8 %v182
    %v460 = vunpack.c.1.s8 %v182
    %v461 = vunpack.c.2.s8 %v182
    %v462 = vunpack.c.3.s8 %v182
    %v463 = vunpack.c.0.s8 %v183
    %v464 = vunpack.c.1.s8 %v183
    %v465 = vunpack.c.2.s8 %v183
    %v466 = vunpack.c.3.s8 %v183
    %v467 = vunpack.c.0.s8 %v184
    %v468 = vunpack.c.1.s8 %v184
    %v469 = vunpack.c.2.s8 %v184
    %v470 = vunpack.c.3.s8 %v184
    %v471 = vunpack.c.0.s8 %v185
    %v472 = vunpack.c.1.s8 %v185
    %v473 = vunpack.c.2.s8 %v185
    %v474 = vunpack.c.3.s8 %v185
    %v475 = vcvt.s32.f32 %v187
    %v476 = vcvt.s32.f32 %v188
    %v477 = vcvt.s32.f32 %v189
    %v478 = vcvt.s32.f32 %v190
    %v479 = vcvt.s32.f32 %v191
    %v480 = vcvt.s32.f32 %v192
    %v481 = vcvt.s32.f32 %v193
    %v482 = vcvt.s32.f32 %v194
    %v483 = vcvt.s32.f32 %v195
    %v484 = vcvt.s32.f32 %v196
    %v485 = vcvt.s32.f32 %v197
    %v486 = vcvt.s32.f32 %v198
    %v487 = vcvt.s32.f32 %v199
    %v488 = vcvt.s32.f32 %v200
    %v489 = vcvt.s32.f32 %v201
    %v490 = vcvt.s32.f32 %v202
    %v491 = vcvt.s32.f32 %v203
    %v492 = vcvt.s32.f32 %v204
    %v493 = vcvt.s32.f32 %v205
    %v494 = vcvt.s32.f32 %v206
    %v495 = vcvt.s32.f32 %v207
    %v496 = vcvt.s32.f32 %v208
    %v497 = vcvt.s32.f32 %v209
    %v498 = vcvt.s32.f32 %v210
    %v499 = vcvt.s32.f32 %v211
    %v500 = vcvt.s32.f32 %v212
    %v501 = vcvt.s32.f32 %v213
    %v502 = vcvt.s32.f32 %v214
    %v503 = vcvt.s32.f32 %v215
    %v504 = vcvt.s32.f32 %v216
    %v505 = vcvt.s32.f32 %v217
    %v506 = vcvt.s32.f32 %v218
    %v507 = vcvt.s32.f32 %v219
    %v508 = vcvt.s32.f32 %v220
    %v509 = vcvt.s32.f32 %v221
    %v510 = vcvt.s32.f32 %v222
    %v511 = vcvt.s32.f32 %v223
    %v512 = vcvt.s32.f32 %v224
    %v513 = vcvt.s32.f32 %v225
    %v514 = vcvt.s32.f32 %v226
    %v515 = vcvt.s32.f32 %v227
    %v516 = vcvt.s32.f32 %v228
    %v517 = vcvt.s32.f32 %v229
    %v518 = vcvt.s32.f32 %v230
    %v519 = vcvt.s32.f32 %v231
    %v520 = vcvt.s32.f32 %v232
    %v521 = vcvt.s32.f32 %v233
    %v522 = vcvt.s32.f32 %v234
    %v523 = vcvt.s32.f32 %v235
    %v524 = vcvt.s32.f32 %v236
    %v525 = vcvt.s32.f32 %v237
    %v526 = vcvt.s32.f32 %v238
    %v527 = vcvt.s32.f32 %v239
    %v528 = vcvt.s32.f32 %v240
    %v529 = vcvt.s32.f32 %v241
    %v530 = vcvt.s32.f32 %v242
    %v531 = vcvt.s32.f32 %v243
    %v532 = vcvt.s32.f32 %v244
    %v533 = vcvt.s32.f32 %v245
    %v534 = vcvt.s32.f32 %v246
    %v535 = vcvt.s32.f32 %v247
    %v536 = vcvt.s32.f32 %v248
    %v537 = vcvt.s32.f32 %v249
    %v538 = vcvt.s32.f32 %v250
    %v539 = vcvt.s32.f32 %v251
    %v540 = vcvt.s32.f32 %v252
    %v541 = vcvt.s32.f32 %v253
    %v542 = vcvt.s32.f32 %v254
    %v543 = vcvt.s32.f32 %v255
    %v544 = vcvt.s32.f32 %v256
    %v545 = vcvt.s32.f32 %v257
    %v546 = vcvt.s32.f32 %v258
    %v547 = vcvt.s32.f32 %v259
    %v548 = vcvt.s32.f32 %v260
    %v549 = vcvt.s32.f32 %v261
    %v550 = vcvt.s32.f32 %v262
    %v551 = vcvt.s32.f32 %v263
    %v552 = vcvt.s32.f32 %v264
    %v553 = vcvt.s32.f32 %v265
    %v554 = vcvt.s32.f32 %v266
    %v555 = vcvt.s32.f32 %v267
    %v556 = vcvt.s32.f32 %v268
    %v557 = vcvt.s32.f32 %v269
    %v558 = vcvt.s32.f32 %v270
    %v559 = vcvt.s32.f32 %v271
    %v560 = vcvt.s32.f32 %v272
    %v561 = vcvt.s32.f32 %v273
    %v562 = vcvt.s32.f32 %v274
    %v563 = vcvt.s32.f32 %v275
    %v564 = vcvt.s32.f32 %v276
    %v565 = vcvt.s32.f32 %v277
    %v566 = vcvt.s32.f32 %v278
    %v567 = vcvt.s32.f32 %v279
    %v568 = vcvt.s32.f32 %v280
    %v569 = vcvt.s32.f32 %v281
    %v570 = vcvt.s32.f32 %v282
    %v571 = vcvt.s32.f32 %v283
    %v572 = vcvt.s32.f32 %v284
    %v573 = vcvt.s32.f32 %v285
    %v574 = vcvt.s32.f32 %v286
    %v575 = vcvt.s32.f32 %v287
    %v576 = vcvt.s32.f32 %v288
    %v577 = vcvt.s32.f32 %v289
    %v578 = vcvt.s32.f32 %v290
    %v579 = vcvt.s32.f32 %v291
    %v580 = vcvt.s32.f32 %v292
    %v581 = vcvt.s32.f32 %v293
    %v582 = vcvt.s32.f32 %v294
    %v583 = vcvt.s32.f32 %v295
    %v584 = vcvt.s32.f32 %v296
    %v585 = vcvt.s32.f32 %v297
    %v586 = vcvt.s32.f32 %v298
    %v587 = vcvt.s32.f32 %v299
    %v588 = vcvt.s32.f32 %v300
    %v589 = vcvt.s32.f32 %v301
    %v590 = vcvt.s32.f32 %v302
    %v591 = vcvt.s32.f32 %v303
    %v592 = vcvt.s32.f32 %v304
    %v593 = vcvt.s32.f32 %v305
    %v594 = vcvt.s32.f32 %v306
    %v595 = vcvt.s32.f32 %v307
    %v596 = vcvt.s32.f32 %v308
    %v597 = vcvt.s32.f32 %v309
    %v598 = vcvt.s32.f32 %v310
    %v599 = vcvt.s32.f32 %v311
    %v600 = vcvt.s32.f32 %v312
    %v601 = vcvt.s32.f32 %v313
    %v602 = vcvt.s32.f32 %v314
    %v603 = vcvt.s32.f32 %v315
    %v604 = vcvt.s32.f32 %v316
    %v605 = vcvt.s32.f32 %v317
    %v606 = vcvt.s32.f32 %v318
    %v607 = vcvt.s32.f32 %v319
    %v608 = vcvt.s32.f32 %v320
    %v609 = vcvt.s32.f32 %v321
    %v610 = vcvt.s32.f32 %v322
    %v611 = vcvt.s32.f32 %v323
    %v612 = vcvt.s32.f32 %v324
    %v613 = vcvt.s32.f32 %v325
    %v614 = vcvt.s32.f32 %v326
    %v615 = vcvt.s32.f32 %v327
    %v616 = vcvt.s32.f32 %v328
    %v617 = vcvt.s32.f32 %v329
    %v618 = vcvt.s32.f32 %v330
    %v619 = vcvt.s32.f32 %v331
    %v620 = vcvt.s32.f32 %v332
    %v621 = vcvt.s32.f32 %v333
    %v622 = vcvt.s32.f32 %v334
    %v623 = vcvt.s32.f32 %v335
    %v624 = vcvt.s32.f32 %v336
    %v625 = vcvt.s32.f32 %v337
    %v626 = vcvt.s32.f32 %v338
    %v627 = vcvt.s32.f32 %v339
    %v628 = vcvt.s32.f32 %v340
    %v629 = vcvt.s32.f32 %v341
    %v630 = vcvt.s32.f32 %v342
    %v631 = vcvt.s32.f32 %v343
    %v632 = vcvt.s32.f32 %v344
    %v633 = vcvt.s32.f32 %v345
    %v634 = vcvt.s32.f32 %v346
    %v635 = vcvt.s32.f32 %v347
    %v636 = vcvt.s32.f32 %v348
    %v637 = vcvt.s32.f32 %v349
    %v638 = vcvt.s32.f32 %v350
    %v639 = vcvt.s32.f32 %v351
    %v640 = vcvt.s32.f32 %v352
    %v641 = vcvt.s32.f32 %v353
    %v642 = vcvt.s32.f32 %v354
    %v643 = vcvt.s32.f32 %v355
    %v644 = vcvt.s32.f32 %v356
    %v645 = vcvt.s32.f32 %v357
    %v646 = vcvt.s32.f32 %v358
    %v647 = vcvt.s32.f32 %v359
    %v648 = vcvt.s32.f32 %v360
    %v649 = vcvt.s32.f32 %v361
    %v650 = vcvt.s32.f32 %v362
    %v651 = vcvt.s32.f32 %v363
    %v652 = vcvt.s32.f32 %v364
    %v653 = vcvt.s32.f32 %v365
    %v654 = vcvt.s32.f32 %v366
    %v655 = vcvt.s32.f32 %v367
    %v656 = vcvt.s32.f32 %v368
    %v657 = vcvt.s32.f32 %v369
    %v658 = vcvt.s32.f32 %v370
    %v659 = vcvt.s32.f32 %v371
    %v660 = vcvt.s32.f32 %v372
    %v661 = vcvt.s32.f32 %v373
    %v662 = vcvt.s32.f32 %v374
    %v663 = vcvt.s32.f32 %v375
    %v664 = vcvt.s32.f32 %v376
    %v665 = vcvt.s32.f32 %v377
    %v666 = vcvt.s32.f32 %v378
    %v667 = vcvt.s32.f32 %v379
    %v668 = vcvt.s32.f32 %v380
    %v669 = vcvt.s32.f32 %v381
    %v670 = vcvt.s32.f32 %v382
    %v671 = vcvt.s32.f32 %v383
    %v672 = vcvt.s32.f32 %v384
    %v673 = vcvt.s32.f32 %v385
    %v674 = vcvt.s32.f32 %v386
    %v675 = vcvt.s32.f32 %v387
    %v676 = vcvt.s32.f32 %v388
    %v677 = vcvt.s32.f32 %v389
    %v678 = vcvt.s32.f32 %v390
    %v679 = vcvt.s32.f32 %v391
    %v680 = vcvt.s32.f32 %v392
    %v681 = vcvt.s32.f32 %v393
    %v682 = vcvt.s32.f32 %v394
    %v683 = vcvt.s32.f32 %v395
    %v684 = vcvt.s32.f32 %v396
    %v685 = vcvt.s32.f32 %v397
    %v686 = vcvt.s32.f32 %v398
    %v687 = vcvt.s32.f32 %v399
    %v688 = vcvt.s32.f32 %v400
    %v689 = vcvt.s32.f32 %v401
    %v690 = vcvt.s32.f32 %v402
    %v691 = vcvt.s32.f32 %v403
    %v692 = vcvt.s32.f32 %v404
    %v693 = vcvt.s32.f32 %v405
    %v694 = vcvt.s32.f32 %v406
    %v695 = vcvt.s32.f32 %v407
    %v696 = vcvt.s32.f32 %v408
    %v697 = vcvt.s32.f32 %v409
    %v698 = vcvt.s32.f32 %v410
    %v699 = vcvt.s32.f32 %v411
    %v700 = vcvt.s32.f32 %v412
    %v701 = vcvt.s32.f32 %v413
    %v702 = vcvt.s32.f32 %v414
    %v703 = vcvt.s32.f32 %v415
    %v704 = vcvt.s32.f32 %v416
    %v705 = vcvt.s32.f32 %v417
    %v706 = vcvt.s32.f32 %v418
    %v707 = vcvt.s32.f32 %v419
    %v708 = vcvt.s32.f32 %v420
    %v709 = vcvt.s32.f32 %v421
    %v710 = vcvt.s32.f32 %v422
    %v711 = vcvt.s32.f32 %v423
    %v712 = vcvt.s32.f32 %v424
    %v713 = vcvt.s32.f32 %v425
    %v714 = vcvt.s32.f32 %v426
    %v715 = vcvt.s32.f32 %v427
    %v716 = vcvt.s32.f32 %v428
    %v717 = vcvt.s32.f32 %v429
    %v718 = vcvt.s32.f32 %v430
    %v719 = vcvt.s32.f32 %v431
    %v720 = vcvt.s32.f32 %v432
    %v721 = vcvt.s32.f32 %v433
    %v722 = vcvt.s32.f32 %v434
    %v723 = vcvt.s32.f32 %v435
    %v724 = vcvt.s32.f32 %v436
    %v725 = vcvt.s32.f32 %v437
    %v726 = vcvt.s32.f32 %v438
    %v727 = vcvt.s32.f32 %v439
    %v728 = vcvt.s32.f32 %v440
    %v729 = vcvt.s32.f32 %v441
    %v730 = vcvt.s32.f32 %v442
    %v731 = vcvt.s32.f32 %v443
    %v732 = vcvt.s32.f32 %v444
    %v733 = vcvt.s32.f32 %v445
    %v734 = vcvt.s32.f32 %v446
    %v735 = vcvt.s32.f32 %v447
    %v736 = vcvt.s32.f32 %v448
    %v737 = vcvt.s32.f32 %v449
    %v738 = vcvt.s32.f32 %v450
    %v739 = vcvt.s32.f32 %v451
    %v740 = vcvt.s32.f32 %v452
    %v741 = vcvt.s32.f32 %v453
    %v742 = vcvt.s32.f32 %v454
    %v743 = vcvt.s32.f32 %v455
    %v744 = vcvt.s32.f32 %v456
    %v745 = vcvt.s32.f32 %v457
    %v746 = vcvt.s32.f32 %v458
    %v747 = vcvt.s32.f32 %v459
    %v748 = vcvt.s32.f32 %v460
    %v749 = vcvt.s32.f32 %v461
    %v750 = vcvt.s32.f32 %v462
    %v751 = vcvt.s32.f32 %v463
    %v752 = vcvt.s32.f32 %v464
    %v753 = vcvt.s32.f32 %v465
    %v754 = vcvt.s32.f32 %v466
    %v755 = vcvt.s32.f32 %v467
    %v756 = vcvt.s32.f32 %v468
    %v757 = vcvt.s32.f32 %v469
    %v758 = vcvt.s32.f32 %v470
    %v759 = vcvt.s32.f32 %v471
    %v760 = vcvt.s32.f32 %v472
    %v761 = vcvt.s32.f32 %v473
    %v762 = vcvt.s32.f32 %v474
    %v764 = vlaneseq
    %v765 = vshrl.u32 %v764, 7
    %v766 = vsub.s32 0, %v765
    %v767 = vrot.slane %v186, %v766
    %v769 = vmul.f32 %v475, %v767
    %v770 = vmul.f32 %v476, %v767
    %v771 = vmul.f32 %v477, %v767
    %v772 = vmul.f32 %v478, %v767
    %v773 = vmul.f32 %v479, %v767
    %v774 = vmul.f32 %v480, %v767
    %v775 = vmul.f32 %v481, %v767
    %v776 = vmul.f32 %v482, %v767
    %v777 = vmul.f32 %v483, %v767
    %v778 = vmul.f32 %v484, %v767
    %v779 = vmul.f32 %v485, %v767
    %v780 = vmul.f32 %v486, %v767
    %v781 = vmul.f32 %v487, %v767
    %v782 = vmul.f32 %v488, %v767
    %v783 = vmul.f32 %v489, %v767
    %v784 = vmul.f32 %v490, %v767
    %v785 = vmul.f32 %v491, %v767
    %v786 = vmul.f32 %v492, %v767
    %v787 = vmul.f32 %v493, %v767
    %v788 = vmul.f32 %v494, %v767
    %v789 = vmul.f32 %v495, %v767
    %v790 = vmul.f32 %v496, %v767
    %v791 = vmul.f32 %v497, %v767
    %v792 = vmul.f32 %v498, %v767
    %v793 = vmul.f32 %v499, %v767
    %v794 = vmul.f32 %v500, %v767
    %v795 = vmul.f32 %v501, %v767
    %v796 = vmul.f32 %v502, %v767
    %v797 = vmul.f32 %v503, %v767
    %v798 = vmul.f32 %v504, %v767
    %v799 = vmul.f32 %v505, %v767
    %v800 = vmul.f32 %v506, %v767
    %v801 = vmul.f32 %v507, %v767
    %v802 = vmul.f32 %v508, %v767
    %v803 = vmul.f32 %v509, %v767
    %v804 = vmul.f32 %v510, %v767
    %v805 = vmul.f32 %v511, %v767
    %v806 = vmul.f32 %v512, %v767
    %v807 = vmul.f32 %v513, %v767
    %v808 = vmul.f32 %v514, %v767
    %v809 = vmul.f32 %v515, %v767
    %v810 = vmul.f32 %v516, %v767
    %v811 = vmul.f32 %v517, %v767
    %v812 = vmul.f32 %v518, %v767
    %v813 = vmul.f32 %v519, %v767
    %v814 = vmul.f32 %v520, %v767
    %v815 = vmul.f32 %v521, %v767
    %v816 = vmul.f32 %v522, %v767
    %v817 = vmul.f32 %v523, %v767
    %v818 = vmul.f32 %v524, %v767
    %v819 = vmul.f32 %v525, %v767
    %v820 = vmul.f32 %v526, %v767
    %v821 = vmul.f32 %v527, %v767
    %v822 = vmul.f32 %v528, %v767
    %v823 = vmul.f32 %v529, %v767
    %v824 = vmul.f32 %v530, %v767
    %v825 = vmul.f32 %v531, %v767
    %v826 = vmul.f32 %v532, %v767
    %v827 = vmul.f32 %v533, %v767
    %v828 = vmul.f32 %v534, %v767
    %v829 = vmul.f32 %v535, %v767
    %v830 = vmul.f32 %v536, %v767
    %v831 = vmul.f32 %v537, %v767
    %v832 = vmul.f32 %v538, %v767
    %v833 = vmul.f32 %v539, %v767
    %v834 = vmul.f32 %v540, %v767
    %v835 = vmul.f32 %v541, %v767
    %v836 = vmul.f32 %v542, %v767
    %v837 = vmul.f32 %v543, %v767
    %v838 = vmul.f32 %v544, %v767
    %v839 = vmul.f32 %v545, %v767
    %v840 = vmul.f32 %v546, %v767
    %v841 = vmul.f32 %v547, %v767
    %v842 = vmul.f32 %v548, %v767
    %v843 = vmul.f32 %v549, %v767
    %v844 = vmul.f32 %v550, %v767
    %v845 = vmul.f32 %v551, %v767
    %v846 = vmul.f32 %v552, %v767
    %v847 = vmul.f32 %v553, %v767
    %v848 = vmul.f32 %v554, %v767
    %v849 = vmul.f32 %v555, %v767
    %v850 = vmul.f32 %v556, %v767
    %v851 = vmul.f32 %v557, %v767
    %v852 = vmul.f32 %v558, %v767
    %v853 = vmul.f32 %v559, %v767
    %v854 = vmul.f32 %v560, %v767
    %v855 = vmul.f32 %v561, %v767
    %v856 = vmul.f32 %v562, %v767
    %v857 = vmul.f32 %v563, %v767
    %v858 = vmul.f32 %v564, %v767
    %v859 = vmul.f32 %v565, %v767
    %v860 = vmul.f32 %v566, %v767
    %v861 = vmul.f32 %v567, %v767
    %v862 = vmul.f32 %v568, %v767
    %v863 = vmul.f32 %v569, %v767
    %v864 = vmul.f32 %v570, %v767
    %v865 = vmul.f32 %v571, %v767
    %v866 = vmul.f32 %v572, %v767
    %v867 = vmul.f32 %v573, %v767
    %v868 = vmul.f32 %v574, %v767
    %v869 = vmul.f32 %v575, %v767
    %v870 = vmul.f32 %v576, %v767
    %v871 = vmul.f32 %v577, %v767
    %v872 = vmul.f32 %v578, %v767
    %v873 = vmul.f32 %v579, %v767
    %v874 = vmul.f32 %v580, %v767
    %v875 = vmul.f32 %v581, %v767
    %v876 = vmul.f32 %v582, %v767
    %v877 = vmul.f32 %v583, %v767
    %v878 = vmul.f32 %v584, %v767
    %v879 = vmul.f32 %v585, %v767
    %v880 = vmul.f32 %v586, %v767
    %v881 = vmul.f32 %v587, %v767
    %v882 = vmul.f32 %v588, %v767
    %v883 = vmul.f32 %v589, %v767
    %v884 = vmul.f32 %v590, %v767
    %v885 = vmul.f32 %v591, %v767
    %v886 = vmul.f32 %v592, %v767
    %v887 = vmul.f32 %v593, %v767
    %v888 = vmul.f32 %v594, %v767
    %v889 = vmul.f32 %v595, %v767
    %v890 = vmul.f32 %v596, %v767
    %v891 = vmul.f32 %v597, %v767
    %v892 = vmul.f32 %v598, %v767
    %v893 = vmul.f32 %v599, %v767
    %v894 = vmul.f32 %v600, %v767
    %v895 = vmul.f32 %v601, %v767
    %v896 = vmul.f32 %v602, %v767
    %v897 = vmul.f32 %v603, %v767
    %v898 = vmul.f32 %v604, %v767
    %v899 = vmul.f32 %v605, %v767
    %v900 = vmul.f32 %v606, %v767
    %v901 = vmul.f32 %v607, %v767
    %v902 = vmul.f32 %v608, %v767
    %v903 = vmul.f32 %v609, %v767
    %v904 = vmul.f32 %v610, %v767
    %v905 = vmul.f32 %v611, %v767
    %v906 = vmul.f32 %v612, %v767
    %v907 = vmul.f32 %v613, %v767
    %v908 = vmul.f32 %v614, %v767
    %v909 = vmul.f32 %v615, %v767
    %v910 = vmul.f32 %v616, %v767
    %v911 = vmul.f32 %v617, %v767
    %v912 = vmul.f32 %v618, %v767
    %v913 = vmul.f32 %v619, %v767
    %v914 = vmul.f32 %v620, %v767
    %v915 = vmul.f32 %v621, %v767
    %v916 = vmul.f32 %v622, %v767
    %v917 = vmul.f32 %v623, %v767
    %v918 = vmul.f32 %v624, %v767
    %v919 = vmul.f32 %v625, %v767
    %v920 = vmul.f32 %v626, %v767
    %v921 = vmul.f32 %v627, %v767
    %v922 = vmul.f32 %v628, %v767
    %v923 = vmul.f32 %v629, %v767
    %v924 = vmul.f32 %v630, %v767
    %v925 = vmul.f32 %v631, %v767
    %v926 = vmul.f32 %v632, %v767
    %v927 = vmul.f32 %v633, %v767
    %v928 = vmul.f32 %v634, %v767
    %v929 = vmul.f32 %v635, %v767
    %v930 = vmul.f32 %v636, %v767
    %v931 = vmul.f32 %v637, %v767
    %v932 = vmul.f32 %v638, %v767
    %v933 = vmul.f32 %v639, %v767
    %v934 = vmul.f32 %v640, %v767
    %v935 = vmul.f32 %v641, %v767
    %v936 = vmul.f32 %v642, %v767
    %v937 = vmul.f32 %v643, %v767
    %v938 = vmul.f32 %v644, %v767
    %v939 = vmul.f32 %v645, %v767
    %v940 = vmul.f32 %v646, %v767
    %v941 = vmul.f32 %v647, %v767
    %v942 = vmul.f32 %v648, %v767
    %v943 = vmul.f32 %v649, %v767
    %v944 = vmul.f32 %v650, %v767
    %v945 = vmul.f32 %v651, %v767
    %v946 = vmul.f32 %v652, %v767
    %v947 = vmul.f32 %v653, %v767
    %v948 = vmul.f32 %v654, %v767
    %v949 = vmul.f32 %v655, %v767
    %v950 = vmul.f32 %v656, %v767
    %v951 = vmul.f32 %v657, %v767
    %v952 = vmul.f32 %v658, %v767
    %v953 = vmul.f32 %v659, %v767
    %v954 = vmul.f32 %v660, %v767
    %v955 = vmul.f32 %v661, %v767
    %v956 = vmul.f32 %v662, %v767
    %v957 = vmul.f32 %v663, %v767
    %v958 = vmul.f32 %v664, %v767
    %v959 = vmul.f32 %v665, %v767
    %v960 = vmul.f32 %v666, %v767
    %v961 = vmul.f32 %v667, %v767
    %v962 = vmul.f32 %v668, %v767
    %v963 = vmul.f32 %v669, %v767
    %v964 = vmul.f32 %v670, %v767
    %v965 = vmul.f32 %v671, %v767
    %v966 = vmul.f32 %v672, %v767
    %v967 = vmul.f32 %v673, %v767
    %v968 = vmul.f32 %v674, %v767
    %v969 = vmul.f32 %v675, %v767
    %v970 = vmul.f32 %v676, %v767
    %v971 = vmul.f32 %v677, %v767
    %v972 = vmul.f32 %v678, %v767
    %v973 = vmul.f32 %v679, %v767
    %v974 = vmul.f32 %v680, %v767
    %v975 = vmul.f32 %v681, %v767
    %v976 = vmul.f32 %v682, %v767
    %v977 = vmul.f32 %v683, %v767
    %v978 = vmul.f32 %v684, %v767
    %v979 = vmul.f32 %v685, %v767
    %v980 = vmul.f32 %v686, %v767
    %v981 = vmul.f32 %v687, %v767
    %v982 = vmul.f32 %v688, %v767
    %v983 = vmul.f32 %v689, %v767
    %v984 = vmul.f32 %v690, %v767
    %v985 = vmul.f32 %v691, %v767
    %v986 = vmul.f32 %v692, %v767
    %v987 = vmul.f32 %v693, %v767
    %v988 = vmul.f32 %v694, %v767
    %v989 = vmul.f32 %v695, %v767
    %v990 = vmul.f32 %v696, %v767
    %v991 = vmul.f32 %v697, %v767
    %v992 = vmul.f32 %v698, %v767
    %v993 = vmul.f32 %v699, %v767
    %v994 = vmul.f32 %v700, %v767
    %v995 = vmul.f32 %v701, %v767
    %v996 = vmul.f32 %v702, %v767
    %v997 = vmul.f32 %v703, %v767
    %v998 = vmul.f32 %v704, %v767
    %v999 = vmul.f32 %v705, %v767
    %v1000 = vmul.f32 %v706, %v767
    %v1001 = vmul.f32 %v707, %v767
    %v1002 = vmul.f32 %v708, %v767
    %v1003 = vmul.f32 %v709, %v767
    %v1004 = vmul.f32 %v710, %v767
    %v1005 = vmul.f32 %v711, %v767
    %v1006 = vmul.f32 %v712, %v767
    %v1007 = vmul.f32 %v713, %v767
    %v1008 = vmul.f32 %v714, %v767
    %v1009 = vmul.f32 %v715, %v767
    %v1010 = vmul.f32 %v716, %v767
    %v1011 = vmul.f32 %v717, %v767
    %v1012 = vmul.f32 %v718, %v767
    %v1013 = vmul.f32 %v719, %v767
    %v1014 = vmul.f32 %v720, %v767
    %v1015 = vmul.f32 %v721, %v767
    %v1016 = vmul.f32 %v722, %v767
    %v1017 = vmul.f32 %v723, %v767
    %v1018 = vmul.f32 %v724, %v767
    %v1019 = vmul.f32 %v725, %v767
    %v1020 = vmul.f32 %v726, %v767
    %v1021 = vmul.f32 %v727, %v767
    %v1022 = vmul.f32 %v728, %v767
    %v1023 = vmul.f32 %v729, %v767
    %v1024 = vmul.f32 %v730, %v767
    %v1025 = vmul.f32 %v731, %v767
    %v1026 = vmul.f32 %v732, %v767
    %v1027 = vmul.f32 %v733, %v767
    %v1028 = vmul.f32 %v734, %v767
    %v1029 = vmul.f32 %v735, %v767
    %v1030 = vmul.f32 %v736, %v767
    %v1031 = vmul.f32 %v737, %v767
    %v1032 = vmul.f32 %v738, %v767
    %v1033 = vmul.f32 %v739, %v767
    %v1034 = vmul.f32 %v740, %v767
    %v1035 = vmul.f32 %v741, %v767
    %v1036 = vmul.f32 %v742, %v767
    %v1037 = vmul.f32 %v743, %v767
    %v1038 = vmul.f32 %v744, %v767
    %v1039 = vmul.f32 %v745, %v767
    %v1040 = vmul.f32 %v746, %v767
    %v1041 = vmul.f32 %v747, %v767
    %v1042 = vmul.f32 %v748, %v767
    %v1043 = vmul.f32 %v749, %v767
    %v1044 = vmul.f32 %v750, %v767
    %v1045 = vmul.f32 %v751, %v767
    %v1046 = vmul.f32 %v752, %v767
    %v1047 = vmul.f32 %v753, %v767
    %v1048 = vmul.f32 %v754, %v767
    %v1049 = vmul.f32 %v755, %v767
    %v1050 = vmul.f32 %v756, %v767
    %v1051 = vmul.f32 %v757, %v767
    %v1052 = vmul.f32 %v758, %v767
    %v1053 = vmul.f32 %v759, %v767
    %v1054 = vmul.f32 %v760, %v767
    %v1055 = vmul.f32 %v761, %v767
    %v1056 = vmul.f32 %v762, %v767
    %v1057 = vpack.c.bf16 %v770, %v769
    %v1058 = vpack.c.bf16 %v772, %v771
    %v1059 = vpack.c.bf16 %v774, %v773
    %v1060 = vpack.c.bf16 %v776, %v775
    %v1061 = vpack.c.bf16 %v778, %v777
    %v1062 = vpack.c.bf16 %v780, %v779
    %v1063 = vpack.c.bf16 %v782, %v781
    %v1064 = vpack.c.bf16 %v784, %v783
    %v1065 = vpack.c.bf16 %v786, %v785
    %v1066 = vpack.c.bf16 %v788, %v787
    %v1067 = vpack.c.bf16 %v790, %v789
    %v1068 = vpack.c.bf16 %v792, %v791
    %v1069 = vpack.c.bf16 %v794, %v793
    %v1070 = vpack.c.bf16 %v796, %v795
    %v1071 = vpack.c.bf16 %v798, %v797
    %v1072 = vpack.c.bf16 %v800, %v799
    %v1073 = vpack.c.bf16 %v802, %v801
    %v1074 = vpack.c.bf16 %v804, %v803
    %v1075 = vpack.c.bf16 %v806, %v805
    %v1076 = vpack.c.bf16 %v808, %v807
    %v1077 = vpack.c.bf16 %v810, %v809
    %v1078 = vpack.c.bf16 %v812, %v811
    %v1079 = vpack.c.bf16 %v814, %v813
    %v1080 = vpack.c.bf16 %v816, %v815
    %v1081 = vpack.c.bf16 %v818, %v817
    %v1082 = vpack.c.bf16 %v820, %v819
    %v1083 = vpack.c.bf16 %v822, %v821
    %v1084 = vpack.c.bf16 %v824, %v823
    %v1085 = vpack.c.bf16 %v826, %v825
    %v1086 = vpack.c.bf16 %v828, %v827
    %v1087 = vpack.c.bf16 %v830, %v829
    %v1088 = vpack.c.bf16 %v832, %v831
    %v1089 = vpack.c.bf16 %v834, %v833
    %v1090 = vpack.c.bf16 %v836, %v835
    %v1091 = vpack.c.bf16 %v838, %v837
    %v1092 = vpack.c.bf16 %v840, %v839
    %v1093 = vpack.c.bf16 %v842, %v841
    %v1094 = vpack.c.bf16 %v844, %v843
    %v1095 = vpack.c.bf16 %v846, %v845
    %v1096 = vpack.c.bf16 %v848, %v847
    %v1097 = vpack.c.bf16 %v850, %v849
    %v1098 = vpack.c.bf16 %v852, %v851
    %v1099 = vpack.c.bf16 %v854, %v853
    %v1100 = vpack.c.bf16 %v856, %v855
    %v1101 = vpack.c.bf16 %v858, %v857
    %v1102 = vpack.c.bf16 %v860, %v859
    %v1103 = vpack.c.bf16 %v862, %v861
    %v1104 = vpack.c.bf16 %v864, %v863
    %v1105 = vpack.c.bf16 %v866, %v865
    %v1106 = vpack.c.bf16 %v868, %v867
    %v1107 = vpack.c.bf16 %v870, %v869
    %v1108 = vpack.c.bf16 %v872, %v871
    %v1109 = vpack.c.bf16 %v874, %v873
    %v1110 = vpack.c.bf16 %v876, %v875
    %v1111 = vpack.c.bf16 %v878, %v877
    %v1112 = vpack.c.bf16 %v880, %v879
    %v1113 = vpack.c.bf16 %v882, %v881
    %v1114 = vpack.c.bf16 %v884, %v883
    %v1115 = vpack.c.bf16 %v886, %v885
    %v1116 = vpack.c.bf16 %v888, %v887
    %v1117 = vpack.c.bf16 %v890, %v889
    %v1118 = vpack.c.bf16 %v892, %v891
    %v1119 = vpack.c.bf16 %v894, %v893
    %v1120 = vpack.c.bf16 %v896, %v895
    %v1121 = vpack.c.bf16 %v898, %v897
    %v1122 = vpack.c.bf16 %v900, %v899
    %v1123 = vpack.c.bf16 %v902, %v901
    %v1124 = vpack.c.bf16 %v904, %v903
    %v1125 = vpack.c.bf16 %v906, %v905
    %v1126 = vpack.c.bf16 %v908, %v907
    %v1127 = vpack.c.bf16 %v910, %v909
    %v1128 = vpack.c.bf16 %v912, %v911
    %v1129 = vpack.c.bf16 %v914, %v913
    %v1130 = vpack.c.bf16 %v916, %v915
    %v1131 = vpack.c.bf16 %v918, %v917
    %v1132 = vpack.c.bf16 %v920, %v919
    %v1133 = vpack.c.bf16 %v922, %v921
    %v1134 = vpack.c.bf16 %v924, %v923
    %v1135 = vpack.c.bf16 %v926, %v925
    %v1136 = vpack.c.bf16 %v928, %v927
    %v1137 = vpack.c.bf16 %v930, %v929
    %v1138 = vpack.c.bf16 %v932, %v931
    %v1139 = vpack.c.bf16 %v934, %v933
    %v1140 = vpack.c.bf16 %v936, %v935
    %v1141 = vpack.c.bf16 %v938, %v937
    %v1142 = vpack.c.bf16 %v940, %v939
    %v1143 = vpack.c.bf16 %v942, %v941
    %v1144 = vpack.c.bf16 %v944, %v943
    %v1145 = vpack.c.bf16 %v946, %v945
    %v1146 = vpack.c.bf16 %v948, %v947
    %v1147 = vpack.c.bf16 %v950, %v949
    %v1148 = vpack.c.bf16 %v952, %v951
    %v1149 = vpack.c.bf16 %v954, %v953
    %v1150 = vpack.c.bf16 %v956, %v955
    %v1151 = vpack.c.bf16 %v958, %v957
    %v1152 = vpack.c.bf16 %v960, %v959
    %v1153 = vpack.c.bf16 %v962, %v961
    %v1154 = vpack.c.bf16 %v964, %v963
    %v1155 = vpack.c.bf16 %v966, %v965
    %v1156 = vpack.c.bf16 %v968, %v967
    %v1157 = vpack.c.bf16 %v970, %v969
    %v1158 = vpack.c.bf16 %v972, %v971
    %v1159 = vpack.c.bf16 %v974, %v973
    %v1160 = vpack.c.bf16 %v976, %v975
    %v1161 = vpack.c.bf16 %v978, %v977
    %v1162 = vpack.c.bf16 %v980, %v979
    %v1163 = vpack.c.bf16 %v982, %v981
    %v1164 = vpack.c.bf16 %v984, %v983
    %v1165 = vpack.c.bf16 %v986, %v985
    %v1166 = vpack.c.bf16 %v988, %v987
    %v1167 = vpack.c.bf16 %v990, %v989
    %v1168 = vpack.c.bf16 %v992, %v991
    %v1169 = vpack.c.bf16 %v994, %v993
    %v1170 = vpack.c.bf16 %v996, %v995
    %v1171 = vpack.c.bf16 %v998, %v997
    %v1172 = vpack.c.bf16 %v1000, %v999
    %v1173 = vpack.c.bf16 %v1002, %v1001
    %v1174 = vpack.c.bf16 %v1004, %v1003
    %v1175 = vpack.c.bf16 %v1006, %v1005
    %v1176 = vpack.c.bf16 %v1008, %v1007
    %v1177 = vpack.c.bf16 %v1010, %v1009
    %v1178 = vpack.c.bf16 %v1012, %v1011
    %v1179 = vpack.c.bf16 %v1014, %v1013
    %v1180 = vpack.c.bf16 %v1016, %v1015
    %v1181 = vpack.c.bf16 %v1018, %v1017
    %v1182 = vpack.c.bf16 %v1020, %v1019
    %v1183 = vpack.c.bf16 %v1022, %v1021
    %v1184 = vpack.c.bf16 %v1024, %v1023
    %v1185 = vpack.c.bf16 %v1026, %v1025
    %v1186 = vpack.c.bf16 %v1028, %v1027
    %v1187 = vpack.c.bf16 %v1030, %v1029
    %v1188 = vpack.c.bf16 %v1032, %v1031
    %v1189 = vpack.c.bf16 %v1034, %v1033
    %v1190 = vpack.c.bf16 %v1036, %v1035
    %v1191 = vpack.c.bf16 %v1038, %v1037
    %v1192 = vpack.c.bf16 %v1040, %v1039
    %v1193 = vpack.c.bf16 %v1042, %v1041
    %v1194 = vpack.c.bf16 %v1044, %v1043
    %v1195 = vpack.c.bf16 %v1046, %v1045
    %v1196 = vpack.c.bf16 %v1048, %v1047
    %v1197 = vpack.c.bf16 %v1050, %v1049
    %v1198 = vpack.c.bf16 %v1052, %v1051
    %v1199 = vpack.c.bf16 %v1054, %v1053
    %v1200 = vpack.c.bf16 %v1056, %v1055
    %v1201 = vld [vmem:[#allocation2] sm:$0xff]
    %v1202 = vld [vmem:[#allocation2 + $0x8] sm:$0xff]
    %v1203 = vld [vmem:[#allocation2 + $0x10] sm:$0xff]
    %v1204 = vld [vmem:[#allocation2 + $0x18] sm:$0xff]
    %v1205 = vld [vmem:[#allocation2 + $0x20] sm:$0xff]
    %v1206 = vld [vmem:[#allocation2 + $0x28] sm:$0xff]
    %v1207 = vld [vmem:[#allocation2 + $0x30] sm:$0xff]
    %v1208 = vld [vmem:[#allocation2 + $0x38] sm:$0xff]
    %v1209 = vld [vmem:[#allocation2 + $0x40] sm:$0xff]
    %v1210 = vld [vmem:[#allocation2 + $0x48] sm:$0xff]
    %v1211 = vld [vmem:[#allocation2 + $0x50] sm:$0xff]
    %v1212 = vld [vmem:[#allocation2 + $0x58] sm:$0xff]
    %v1213 = vld [vmem:[#allocation2 + $0x60] sm:$0xff]
    %v1214 = vld [vmem:[#allocation2 + $0x68] sm:$0xff]
    %v1215 = vld [vmem:[#allocation2 + $0x70] sm:$0xff]
    %v1216 = vld [vmem:[#allocation2 + $0x78] sm:$0xff]
    %v1217 = vld [vmem:[#allocation2 + $0x80] sm:$0xff]
    %v1218 = vld [vmem:[#allocation2 + $0x88] sm:$0xff]
    %v1219 = vld [vmem:[%s3] sm:$0x1]
    %v1221 = vlaneseq
    %v1222 = vshrl.u32 %v1221, 7
    %v1223 = vsub.s32 0, %v1222
    %v1224 = vrot.slane %v1219, %v1223
    %1226 = vmatprep.subr.bf16.mxu0 0
    %1227 = vmatpush1.bf16.msra.mxu0 %v1057
    %1228 = vmatprep.subr.bf16.mxu0 0
    %1229 = vmatpush1.bf16.msra.mxu0 %v1058
    %1230 = vmatprep.subr.bf16.mxu0 0
    %1231 = vmatpush1.bf16.msra.mxu0 %v1059
    %1232 = vmatprep.subr.bf16.mxu0 0
    %1233 = vmatpush1.bf16.msra.mxu0 %v1060
    %1234 = vmatprep.subr.bf16.mxu0 0
    %1235 = vmatpush1.bf16.msra.mxu0 %v1061
    %1236 = vmatprep.subr.bf16.mxu0 0
    %1237 = vmatpush1.bf16.msra.mxu0 %v1062
    %1238 = vmatprep.subr.bf16.mxu0 0
    %1239 = vmatpush1.bf16.msra.mxu0 %v1063
    %1240 = vmatprep.subr.bf16.mxu0 0
    %1241 = vmatpush1.bf16.msra.mxu0 %v1064
    %1242 = vmatprep.subr.bf16.mxu0 0
    %1243 = vmatpush1.bf16.msra.mxu0 %v1065
    %1244 = vmatprep.subr.bf16.mxu0 0
    %1245 = vmatpush1.bf16.msra.mxu0 %v1066
    %1246 = vmatprep.subr.bf16.mxu0 0
    %1247 = vmatpush1.bf16.msra.mxu0 %v1067
    %1248 = vmatprep.subr.bf16.mxu0 0
    %1249 = vmatpush1.bf16.msra.mxu0 %v1068
    %1250 = vmatprep.subr.bf16.mxu0 0
    %1251 = vmatpush1.bf16.msra.mxu0 %v1069
    %1252 = vmatprep.subr.bf16.mxu0 0
    %1253 = vmatpush1.bf16.msra.mxu0 %v1070
    %1254 = vmatprep.subr.bf16.mxu0 0
    %1255 = vmatpush1.bf16.msra.mxu0 %v1071
    %1256 = vmatprep.subr.bf16.mxu0 0
    %1257 = vmatpush1.bf16.msra.mxu0 %v1072
    %1258 = vmatprep.mubr.bf16.mxu0 %v1202
    %1259 = vmatmul.mubr.bf16.gmra.mrb[0].mxu0 %v1201
    %v1260 = vpop.f32.mrb[0].mxu0
    %v1261 = vadd.f32 %v1224, %v1260
    %v1262 = vpop.f32.mrb[0].mxu0
    %v1263 = vpop.f32.mrb[0].mxu0
    %v1264 = vadd.f32 %v1224, %v1263
    %v1265 = vpop.f32.mrb[0].mxu0
    %1266 = vdwg.mxu0
    %1267 = vmatprep.subr.bf16.mxu0 0
    %1268 = vmatpush1.bf16.msra.mxu0 %v1073
    %1269 = vmatprep.subr.bf16.mxu0 0
    %1270 = vmatpush1.bf16.msra.mxu0 %v1074
    %1271 = vmatprep.subr.bf16.mxu0 0
    %1272 = vmatpush1.bf16.msra.mxu0 %v1075
    %1273 = vmatprep.subr.bf16.mxu0 0
    %1274 = vmatpush1.bf16.msra.mxu0 %v1076
    %1275 = vmatprep.subr.bf16.mxu0 0
    %1276 = vmatpush1.bf16.msra.mxu0 %v1077
    %1277 = vmatprep.subr.bf16.mxu0 0
    %1278 = vmatpush1.bf16.msra.mxu0 %v1078
    %1279 = vmatprep.subr.bf16.mxu0 0
    %1280 = vmatpush1.bf16.msra.mxu0 %v1079
    %1281 = vmatprep.subr.bf16.mxu0 0
    %1282 = vmatpush1.bf16.msra.mxu0 %v1080
    %1283 = vmatprep.subr.bf16.mxu0 0
    %1284 = vmatpush1.bf16.msra.mxu0 %v1081
    %1285 = vmatprep.subr.bf16.mxu0 0
    %1286 = vmatpush1.bf16.msra.mxu0 %v1082
    %1287 = vmatprep.subr.bf16.mxu0 0
    %1288 = vmatpush1.bf16.msra.mxu0 %v1083
    %1289 = vmatprep.subr.bf16.mxu0 0
    %1290 = vmatpush1.bf16.msra.mxu0 %v1084
    %1291 = vmatprep.subr.bf16.mxu0 0
    %1292 = vmatpush1.bf16.msra.mxu0 %v1085
    %1293 = vmatprep.subr.bf16.mxu0 0
    %1294 = vmatpush1.bf16.msra.mxu0 %v1086
    %1295 = vmatprep.subr.bf16.mxu0 0
    %1296 = vmatpush1.bf16.msra.mxu0 %v1087
    %1297 = vmatprep.subr.bf16.mxu0 0
    %1298 = vmatpush1.bf16.msra.mxu0 %v1088
    %1299 = vmatprep.mubr.bf16.mxu0 %v1204
    %1300 = vmatmul.mubr.bf16.gmra.mrb[0].mxu0 %v1203
    %v1301 = vpop.f32.mrb[0].mxu0
    %v1302 = vadd.f32 %v1261, %v1301
    %v1303 = vpop.f32.mrb[0].mxu0
    %v1304 = vpop.f32.mrb[0].mxu0
    %v1305 = vadd.f32 %v1264, %v1304
    %v1306 = vpop.f32.mrb[0].mxu0
    %1307 = vdwg.mxu0
    %1308 = vmatprep.subr.bf16.mxu0 0
    %1309 = vmatpush1.bf16.msra.mxu0 %v1089
    %1310 = vmatprep.subr.bf16.mxu0 0
    %1311 = vmatpush1.bf16.msra.mxu0 %v1090
    %1312 = vmatprep.subr.bf16.mxu0 0
    %1313 = vmatpush1.bf16.msra.mxu0 %v1091
    %1314 = vmatprep.subr.bf16.mxu0 0
    %1315 = vmatpush1.bf16.msra.mxu0 %v1092
    %1316 = vmatprep.subr.bf16.mxu0 0
    %1317 = vmatpush1.bf16.msra.mxu0 %v1093
    %1318 = vmatprep.subr.bf16.mxu0 0
    %1319 = vmatpush1.bf16.msra.mxu0 %v1094
    %1320 = vmatprep.subr.bf16.mxu0 0
    %1321 = vmatpush1.bf16.msra.mxu0 %v1095
    %1322 = vmatprep.subr.bf16.mxu0 0
    %1323 = vmatpush1.bf16.msra.mxu0 %v1096
    %1324 = vmatprep.subr.bf16.mxu0 0
    %1325 = vmatpush1.bf16.msra.mxu0 %v1097
    %1326 = vmatprep.subr.bf16.mxu0 0
    %1327 = vmatpush1.bf16.msra.mxu0 %v1098
    %1328 = vmatprep.subr.bf16.mxu0 0
    %1329 = vmatpush1.bf16.msra.mxu0 %v1099
    %1330 = vmatprep.subr.bf16.mxu0 0
    %1331 = vmatpush1.bf16.msra.mxu0 %v1100
    %1332 = vmatprep.subr.bf16.mxu0 0
    %1333 = vmatpush1.bf16.msra.mxu0 %v1101
    %1334 = vmatprep.subr.bf16.mxu0 0
    %1335 = vmatpush1.bf16.msra.mxu0 %v1102
    %1336 = vmatprep.subr.bf16.mxu0 0
    %1337 = vmatpush1.bf16.msra.mxu0 %v1103
    %1338 = vmatprep.subr.bf16.mxu0 0
    %1339 = vmatpush1.bf16.msra.mxu0 %v1104
    %1340 = vmatprep.mubr.bf16.mxu0 %v1206
    %1341 = vmatmul.mubr.bf16.gmra.mrb[0].mxu0 %v1205
    %v1342 = vpop.f32.mrb[0].mxu0
    %v1343 = vadd.f32 %v1302, %v1342
    %v1344 = vpop.f32.mrb[0].mxu0
    %v1345 = vpop.f32.mrb[0].mxu0
    %v1346 = vadd.f32 %v1305, %v1345
    %v1347 = vpop.f32.mrb[0].mxu0
    %1348 = vdwg.mxu0
    %1349 = vmatprep.subr.bf16.mxu0 0
    %1350 = vmatpush1.bf16.msra.mxu0 %v1105
    %1351 = vmatprep.subr.bf16.mxu0 0
    %1352 = vmatpush1.bf16.msra.mxu0 %v1106
    %1353 = vmatprep.subr.bf16.mxu0 0
    %1354 = vmatpush1.bf16.msra.mxu0 %v1107
    %1355 = vmatprep.subr.bf16.mxu0 0
    %1356 = vmatpush1.bf16.msra.mxu0 %v1108
    %1357 = vmatprep.subr.bf16.mxu0 0
    %1358 = vmatpush1.bf16.msra.mxu0 %v1109
    %1359 = vmatprep.subr.bf16.mxu0 0
    %1360 = vmatpush1.bf16.msra.mxu0 %v1110
    %1361 = vmatprep.subr.bf16.mxu0 0
    %1362 = vmatpush1.bf16.msra.mxu0 %v1111
    %1363 = vmatprep.subr.bf16.mxu0 0
    %1364 = vmatpush1.bf16.msra.mxu0 %v1112
    %1365 = vmatprep.subr.bf16.mxu0 0
    %1366 = vmatpush1.bf16.msra.mxu0 %v1113
    %1367 = vmatprep.subr.bf16.mxu0 0
    %1368 = vmatpush1.bf16.msra.mxu0 %v1114
    %1369 = vmatprep.subr.bf16.mxu0 0
    %1370 = vmatpush1.bf16.msra.mxu0 %v1115
    %1371 = vmatprep.subr.bf16.mxu0 0
    %1372 = vmatpush1.bf16.msra.mxu0 %v1116
    %1373 = vmatprep.subr.bf16.mxu0 0
    %1374 = vmatpush1.bf16.msra.mxu0 %v1117
    %1375 = vmatprep.subr.bf16.mxu0 0
    %1376 = vmatpush1.bf16.msra.mxu0 %v1118
    %1377 = vmatprep.subr.bf16.mxu0 0
    %1378 = vmatpush1.bf16.msra.mxu0 %v1119
    %1379 = vmatprep.subr.bf16.mxu0 0
    %1380 = vmatpush1.bf16.msra.mxu0 %v1120
    %1381 = vmatprep.mubr.bf16.mxu0 %v1208
    %1382 = vmatmul.mubr.bf16.gmra.mrb[0].mxu0 %v1207
    %v1383 = vpop.f32.mrb[0].mxu0
    %v1384 = vadd.f32 %v1343, %v1383
    %v1385 = vpop.f32.mrb[0].mxu0
    %v1386 = vpop.f32.mrb[0].mxu0
    %v1387 = vadd.f32 %v1346, %v1386
    %v1388 = vpop.f32.mrb[0].mxu0
    %1389 = vdwg.mxu0
    %1390 = vmatprep.subr.bf16.mxu0 0
    %1391 = vmatpush1.bf16.msra.mxu0 %v1121
    %1392 = vmatprep.subr.bf16.mxu0 0
    %1393 = vmatpush1.bf16.msra.mxu0 %v1122
    %1394 = vmatprep.subr.bf16.mxu0 0
    %1395 = vmatpush1.bf16.msra.mxu0 %v1123
    %1396 = vmatprep.subr.bf16.mxu0 0
    %1397 = vmatpush1.bf16.msra.mxu0 %v1124
    %1398 = vmatprep.subr.bf16.mxu0 0
    %1399 = vmatpush1.bf16.msra.mxu0 %v1125
    %1400 = vmatprep.subr.bf16.mxu0 0
    %1401 = vmatpush1.bf16.msra.mxu0 %v1126
    %1402 = vmatprep.subr.bf16.mxu0 0
    %1403 = vmatpush1.bf16.msra.mxu0 %v1127
    %1404 = vmatprep.subr.bf16.mxu0 0
    %1405 = vmatpush1.bf16.msra.mxu0 %v1128
    %1406 = vmatprep.subr.bf16.mxu0 0
    %1407 = vmatpush1.bf16.msra.mxu0 %v1129
    %1408 = vmatprep.subr.bf16.mxu0 0
    %1409 = vmatpush1.bf16.msra.mxu0 %v1130
    %1410 = vmatprep.subr.bf16.mxu0 0
    %1411 = vmatpush1.bf16.msra.mxu0 %v1131
    %1412 = vmatprep.subr.bf16.mxu0 0
    %1413 = vmatpush1.bf16.msra.mxu0 %v1132
    %1414 = vmatprep.subr.bf16.mxu0 0
    %1415 = vmatpush1.bf16.msra.mxu0 %v1133
    %1416 = vmatprep.subr.bf16.mxu0 0
    %1417 = vmatpush1.bf16.msra.mxu0 %v1134
    %1418 = vmatprep.subr.bf16.mxu0 0
    %1419 = vmatpush1.bf16.msra.mxu0 %v1135
    %1420 = vmatprep.subr.bf16.mxu0 0
    %1421 = vmatpush1.bf16.msra.mxu0 %v1136
    %1422 = vmatprep.mubr.bf16.mxu0 %v1210
    %1423 = vmatmul.mubr.bf16.gmra.mrb[0].mxu0 %v1209
    %v1424 = vpop.f32.mrb[0].mxu0
    %v1425 = vadd.f32 %v1384, %v1424
    %v1426 = vpop.f32.mrb[0].mxu0
    %v1427 = vpop.f32.mrb[0].mxu0
    %v1428 = vadd.f32 %v1387, %v1427
    %v1429 = vpop.f32.mrb[0].mxu0
    %1430 = vdwg.mxu0
    %1431 = vmatprep.subr.bf16.mxu0 0
    %1432 = vmatpush1.bf16.msra.mxu0 %v1137
    %1433 = vmatprep.subr.bf16.mxu0 0
    %1434 = vmatpush1.bf16.msra.mxu0 %v1138
    %1435 = vmatprep.subr.bf16.mxu0 0
    %1436 = vmatpush1.bf16.msra.mxu0 %v1139
    %1437 = vmatprep.subr.bf16.mxu0 0
    %1438 = vmatpush1.bf16.msra.mxu0 %v1140
    %1439 = vmatprep.subr.bf16.mxu0 0
    %1440 = vmatpush1.bf16.msra.mxu0 %v1141
    %1441 = vmatprep.subr.bf16.mxu0 0
    %1442 = vmatpush1.bf16.msra.mxu0 %v1142
    %1443 = vmatprep.subr.bf16.mxu0 0
    %1444 = vmatpush1.bf16.msra.mxu0 %v1143
    %1445 = vmatprep.subr.bf16.mxu0 0
    %1446 = vmatpush1.bf16.msra.mxu0 %v1144
    %1447 = vmatprep.subr.bf16.mxu0 0
    %1448 = vmatpush1.bf16.msra.mxu0 %v1145
    %1449 = vmatprep.subr.bf16.mxu0 0
    %1450 = vmatpush1.bf16.msra.mxu0 %v1146
    %1451 = vmatprep.subr.bf16.mxu0 0
    %1452 = vmatpush1.bf16.msra.mxu0 %v1147
    %1453 = vmatprep.subr.bf16.mxu0 0
    %1454 = vmatpush1.bf16.msra.mxu0 %v1148
    %1455 = vmatprep.subr.bf16.mxu0 0
    %1456 = vmatpush1.bf16.msra.mxu0 %v1149
    %1457 = vmatprep.subr.bf16.mxu0 0
    %1458 = vmatpush1.bf16.msra.mxu0 %v1150
    %1459 = vmatprep.subr.bf16.mxu0 0
    %1460 = vmatpush1.bf16.msra.mxu0 %v1151
    %1461 = vmatprep.subr.bf16.mxu0 0
    %1462 = vmatpush1.bf16.msra.mxu0 %v1152
    %1463 = vmatprep.mubr.bf16.mxu0 %v1212
    %1464 = vmatmul.mubr.bf16.gmra.mrb[0].mxu0 %v1211
    %v1465 = vpop.f32.mrb[0].mxu0
    %v1466 = vadd.f32 %v1425, %v1465
    %v1467 = vpop.f32.mrb[0].mxu0
    %v1468 = vpop.f32.mrb[0].mxu0
    %v1469 = vadd.f32 %v1428, %v1468
    %v1470 = vpop.f32.mrb[0].mxu0
    %1471 = vdwg.mxu0
    %1472 = vmatprep.subr.bf16.mxu0 0
    %1473 = vmatpush1.bf16.msra.mxu0 %v1153
    %1474 = vmatprep.subr.bf16.mxu0 0
    %1475 = vmatpush1.bf16.msra.mxu0 %v1154
    %1476 = vmatprep.subr.bf16.mxu0 0
    %1477 = vmatpush1.bf16.msra.mxu0 %v1155
    %1478 = vmatprep.subr.bf16.mxu0 0
    %1479 = vmatpush1.bf16.msra.mxu0 %v1156
    %1480 = vmatprep.subr.bf16.mxu0 0
    %1481 = vmatpush1.bf16.msra.mxu0 %v1157
    %1482 = vmatprep.subr.bf16.mxu0 0
    %1483 = vmatpush1.bf16.msra.mxu0 %v1158
    %1484 = vmatprep.subr.bf16.mxu0 0
    %1485 = vmatpush1.bf16.msra.mxu0 %v1159
    %1486 = vmatprep.subr.bf16.mxu0 0
    %1487 = vmatpush1.bf16.msra.mxu0 %v1160
    %1488 = vmatprep.subr.bf16.mxu0 0
    %1489 = vmatpush1.bf16.msra.mxu0 %v1161
    %1490 = vmatprep.subr.bf16.mxu0 0
    %1491 = vmatpush1.bf16.msra.mxu0 %v1162
    %1492 = vmatprep.subr.bf16.mxu0 0
    %1493 = vmatpush1.bf16.msra.mxu0 %v1163
    %1494 = vmatprep.subr.bf16.mxu0 0
    %1495 = vmatpush1.bf16.msra.mxu0 %v1164
    %1496 = vmatprep.subr.bf16.mxu0 0
    %1497 = vmatpush1.bf16.msra.mxu0 %v1165
    %1498 = vmatprep.subr.bf16.mxu0 0
    %1499 = vmatpush1.bf16.msra.mxu0 %v1166
    %1500 = vmatprep.subr.bf16.mxu0 0
    %1501 = vmatpush1.bf16.msra.mxu0 %v1167
    %1502 = vmatprep.subr.bf16.mxu0 0
    %1503 = vmatpush1.bf16.msra.mxu0 %v1168
    %1504 = vmatprep.mubr.bf16.mxu0 %v1214
    %1505 = vmatmul.mubr.bf16.gmra.mrb[0].mxu0 %v1213
    %v1506 = vpop.f32.mrb[0].mxu0
    %v1507 = vadd.f32 %v1466, %v1506
    %v1508 = vpop.f32.mrb[0].mxu0
    %v1509 = vpop.f32.mrb[0].mxu0
    %v1510 = vadd.f32 %v1469, %v1509
    %v1511 = vpop.f32.mrb[0].mxu0
    %1512 = vdwg.mxu0
    %1513 = vmatprep.subr.bf16.mxu0 0
    %1514 = vmatpush1.bf16.msra.mxu0 %v1169
    %1515 = vmatprep.subr.bf16.mxu0 0
    %1516 = vmatpush1.bf16.msra.mxu0 %v1170
    %1517 = vmatprep.subr.bf16.mxu0 0
    %1518 = vmatpush1.bf16.msra.mxu0 %v1171
    %1519 = vmatprep.subr.bf16.mxu0 0
    %1520 = vmatpush1.bf16.msra.mxu0 %v1172
    %1521 = vmatprep.subr.bf16.mxu0 0
    %1522 = vmatpush1.bf16.msra.mxu0 %v1173
    %1523 = vmatprep.subr.bf16.mxu0 0
    %1524 = vmatpush1.bf16.msra.mxu0 %v1174
    %1525 = vmatprep.subr.bf16.mxu0 0
    %1526 = vmatpush1.bf16.msra.mxu0 %v1175
    %1527 = vmatprep.subr.bf16.mxu0 0
    %1528 = vmatpush1.bf16.msra.mxu0 %v1176
    %1529 = vmatprep.subr.bf16.mxu0 0
    %1530 = vmatpush1.bf16.msra.mxu0 %v1177
    %1531 = vmatprep.subr.bf16.mxu0 0
    %1532 = vmatpush1.bf16.msra.mxu0 %v1178
    %1533 = vmatprep.subr.bf16.mxu0 0
    %1534 = vmatpush1.bf16.msra.mxu0 %v1179
    %1535 = vmatprep.subr.bf16.mxu0 0
    %1536 = vmatpush1.bf16.msra.mxu0 %v1180
    %1537 = vmatprep.subr.bf16.mxu0 0
    %1538 = vmatpush1.bf16.msra.mxu0 %v1181
    %1539 = vmatprep.subr.bf16.mxu0 0
    %1540 = vmatpush1.bf16.msra.mxu0 %v1182
    %1541 = vmatprep.subr.bf16.mxu0 0
    %1542 = vmatpush1.bf16.msra.mxu0 %v1183
    %1543 = vmatprep.subr.bf16.mxu0 0
    %1544 = vmatpush1.bf16.msra.mxu0 %v1184
    %1545 = vmatprep.mubr.bf16.mxu0 %v1216
    %1546 = vmatmul.mubr.bf16.gmra.mrb[0].mxu0 %v1215
    %v1547 = vpop.f32.mrb[0].mxu0
    %v1548 = vadd.f32 %v1507, %v1547
    %v1549 = vpop.f32.mrb[0].mxu0
    %v1550 = vpop.f32.mrb[0].mxu0
    %v1551 = vadd.f32 %v1510, %v1550
    %v1552 = vpop.f32.mrb[0].mxu0
    %1553 = vdwg.mxu0
    %1554 = vmatprep.subr.bf16.mxu0 0
    %1555 = vmatpush1.bf16.msra.mxu0 %v1185
    %1556 = vmatprep.subr.bf16.mxu0 0
    %1557 = vmatpush1.bf16.msra.mxu0 %v1186
    %1558 = vmatprep.subr.bf16.mxu0 0
    %1559 = vmatpush1.bf16.msra.mxu0 %v1187
    %1560 = vmatprep.subr.bf16.mxu0 0
    %1561 = vmatpush1.bf16.msra.mxu0 %v1188
    %1562 = vmatprep.subr.bf16.mxu0 0
    %1563 = vmatpush1.bf16.msra.mxu0 %v1189
    %1564 = vmatprep.subr.bf16.mxu0 0
    %1565 = vmatpush1.bf16.msra.mxu0 %v1190
    %1566 = vmatprep.subr.bf16.mxu0 0
    %1567 = vmatpush1.bf16.msra.mxu0 %v1191
    %1568 = vmatprep.subr.bf16.mxu0 0
    %1569 = vmatpush1.bf16.msra.mxu0 %v1192
    %1570 = vmatprep.subr.bf16.mxu0 0
    %1571 = vmatpush1.bf16.msra.mxu0 %v1193
    %1572 = vmatprep.subr.bf16.mxu0 0
    %1573 = vmatpush1.bf16.msra.mxu0 %v1194
    %1574 = vmatprep.subr.bf16.mxu0 0
    %1575 = vmatpush1.bf16.msra.mxu0 %v1195
    %1576 = vmatprep.subr.bf16.mxu0 0
    %1577 = vmatpush1.bf16.msra.mxu0 %v1196
    %1578 = vmatprep.subr.bf16.mxu0 0
    %1579 = vmatpush1.bf16.msra.mxu0 %v1197
    %1580 = vmatprep.subr.bf16.mxu0 0
    %1581 = vmatpush1.bf16.msra.mxu0 %v1198
    %1582 = vmatprep.subr.bf16.mxu0 0
    %1583 = vmatpush1.bf16.msra.mxu0 %v1199
    %1584 = vmatprep.subr.bf16.mxu0 0
    %1585 = vmatpush1.bf16.msra.mxu0 %v1200
    %1586 = vmatprep.mubr.bf16.mxu0 %v1218
    %1587 = vmatmul.mubr.bf16.gmra.mrb[0].mxu0 %v1217
    %v1588 = vpop.f32.mrb[0].mxu0
    %v1589 = vadd.f32 %v1548, %v1588
    %v1590 = vpop.f32.mrb[0].mxu0
    %v1591 = vpop.f32.mrb[0].mxu0
    %v1592 = vadd.f32 %v1551, %v1591
    %v1593 = vpop.f32.mrb[0].mxu0
    %1594 = vdwg.mxu0
    %vm1595 = vcmp.le.f32.partialorder %v1589, -2.1474836e+09
    %vm1596 = vcmp.le.f32.partialorder %v1592, -2.1474836e+09
    %v1597 = vsel %vm1595, 0.0, %v1589
    %v1598 = vsel %vm1596, 0.0, %v1592
    %vm1599 = vcmp.ge.f32.partialorder %v1597, -2.1474836e+09
    %vm1600 = vcmp.ge.f32.partialorder %v1598, -2.1474836e+09
    %v1601 = vsel %vm1599, 1.0, %v1597
    %v1602 = vsel %vm1600, 1.0, %v1598
    %v1603 = vpack.c.bf16 %v1602, %v1601
    %v1604 = vld [vmem:[#allocation3] sm:$0xf]
    %v1605 = vld [vmem:[#allocation3 + $0x4] sm:$0xf]
    %v1606 = vld [vmem:[#allocation3 + $0x8] sm:$0xf]
    %v1607 = vld [vmem:[#allocation3 + $0xc] sm:$0xf]
    %v1608 = vld [vmem:[#allocation3 + $0x10] sm:$0xf]
    %v1609 = vld [vmem:[#allocation3 + $0x14] sm:$0xf]
    %v1610 = vld [vmem:[#allocation3 + $0x18] sm:$0xf]
    %v1611 = vld [vmem:[#allocation3 + $0x1c] sm:$0xf]
    %v1612 = vld [vmem:[#allocation3 + $0x20] sm:$0xf]
    %v1613 = vld [vmem:[#allocation3 + $0x24] sm:$0xf]
    %v1614 = vld [vmem:[#allocation3 + $0x28] sm:$0xf]
    %v1615 = vld [vmem:[#allocation3 + $0x2c] sm:$0xf]
    %v1616 = vld [vmem:[#allocation3 + $0x30] sm:$0xf]
    %v1617 = vld [vmem:[#allocation3 + $0x34] sm:$0xf]
    %v1618 = vld [vmem:[#allocation3 + $0x38] sm:$0xf]
    %v1619 = vld [vmem:[#allocation3 + $0x3c] sm:$0xf]
    %v1620 = vld [vmem:[%s5] sm:$0x1]
    %v1622 = vlaneseq
    %v1623 = vshrl.u32 %v1622, 7
    %v1624 = vsub.s32 0, %v1623
    %v1625 = vrot.slane %v1620, %v1624
    %v1643 = vunpack.c.l.b16 %v1604
    %v1644 = vunpack.c.l.b16 %v1605
    %v1645 = vunpack.c.l.b16 %v1606
    %v1646 = vunpack.c.l.b16 %v1607
    %v1647 = vunpack.c.l.b16 %v1608
    %v1648 = vunpack.c.l.b16 %v1609
    %v1649 = vunpack.c.l.b16 %v1610
    %v1650 = vunpack.c.l.b16 %v1611
    %v1651 = vunpack.c.l.b16 %v1612
    %v1652 = vunpack.c.l.b16 %v1613
    %v1653 = vunpack.c.l.b16 %v1614
    %v1654 = vunpack.c.l.b16 %v1615
    %v1655 = vunpack.c.l.b16 %v1616
    %v1656 = vunpack.c.l.b16 %v1617
    %v1657 = vunpack.c.l.b16 %v1618
    %v1658 = vunpack.c.l.b16 %v1619
    %v1659 = vpack.c.b16 %v1644, %v1643
    %v1660 = vpack.c.b16 %v1646, %v1645
    %v1661 = vpack.c.b16 %v1648, %v1647
    %v1662 = vpack.c.b16 %v1650, %v1649
    %v1663 = vpack.c.b16 %v1652, %v1651
    %v1664 = vpack.c.b16 %v1654, %v1653
    %v1665 = vpack.c.b16 %v1656, %v1655
    %v1666 = vpack.c.b16 %v1658, %v1657
    %1675 = vmatprep.subr.bf16.mxu0 0
    %1676 = vmatpush1.bf16.msra.mxu0 %v1659
    %1677 = vmatprep.subr.bf16.mxu0 0
    %1678 = vmatpush1.bf16.msra.mxu0 %v1660
    %1679 = vmatprep.subr.bf16.mxu0 0
    %1680 = vmatpush1.bf16.msra.mxu0 %v1661
    %1681 = vmatprep.subr.bf16.mxu0 0
    %1682 = vmatpush1.bf16.msra.mxu0 %v1662
    %1683 = vmatprep.subr.bf16.mxu0 0
    %1684 = vmatpush1.bf16.msra.mxu0 %v1663
    %1685 = vmatprep.subr.bf16.mxu0 0
    %1686 = vmatpush1.bf16.msra.mxu0 %v1664
    %1687 = vmatprep.subr.bf16.mxu0 0
    %1688 = vmatpush1.bf16.msra.mxu0 %v1665
    %1689 = vmatprep.subr.bf16.mxu0 0
    %1690 = vmatpush1.bf16.msra.mxu0 %v1666
    %1691 = vmatprep.subr.bf16.mxu0 0
    %1692 = vmatpush1.bf16.msra.mxu0 0
    %1693 = vmatprep.subr.bf16.mxu0 0
    %1694 = vmatpush1.bf16.msra.mxu0 0
    %1695 = vmatprep.subr.bf16.mxu0 0
    %1696 = vmatpush1.bf16.msra.mxu0 0
    %1697 = vmatprep.subr.bf16.mxu0 0
    %1698 = vmatpush1.bf16.msra.mxu0 0
    %1699 = vmatprep.subr.bf16.mxu0 0
    %1700 = vmatpush1.bf16.msra.mxu0 0
    %1701 = vmatprep.subr.bf16.mxu0 0
    %1702 = vmatpush1.bf16.msra.mxu0 0
    %1703 = vmatprep.subr.bf16.mxu0 0
    %1704 = vmatpush1.bf16.msra.mxu0 0
    %1705 = vmatprep.subr.bf16.mxu0 0
    %1706 = vmatpush1.bf16.msra.mxu0 0
    %1707 = vmatprep.mubr.bf16.mxu0 0
    %1708 = vmatmul.mubr.bf16.gmra.mrb[0].mxu0 %v1603
    %v1709 = vpop.f32.mrb[0].mxu0
    %v1710 = vadd.f32 %v1625, %v1709
    %v1711 = vpop.f32.mrb[0].mxu0
    %v1712 = vpop.f32.mrb[0].mxu0
    %v1713 = vadd.f32 %v1625, %v1712
    %v1714 = vpop.f32.mrb[0].mxu0
    %1715 = vdwg.mxu0
    %vm1716 = vcmp.le.f32.partialorder %v1710, -2.1474836e+09
    %vm1717 = vcmp.le.f32.partialorder %v1713, -2.1474836e+09
    %v1718 = vsel %vm1716, 0.0, %v1710
    %v1719 = vsel %vm1717, 0.0, %v1713
    %vm1720 = vcmp.ge.f32.partialorder %v1718, -2.1474836e+09
    %vm1721 = vcmp.ge.f32.partialorder %v1719, -2.1474836e+09
    %v1722 = vsel %vm1720, 1.0, %v1718
    %v1723 = vsel %vm1721, 1.0, %v1719
    %1724 = vst [vmem:[#allocation6] sm:$0xff] %v1722
    %1725 = vst [vmem:[#allocation6 + $0x8] sm:$0xff] %v1723
    // Predicated region
    $region30: #{net_plain_forward.1} parent=1 // pred_check
      _
    $region31: #{net_plain_forward.1} parent=1 // pred_check_branch
      %1727 = sbr.rel (0) target = $region33
    $region32: #{net_plain_forward.1} parent=1 // pred_region
      %s1729 = ssub.s32 256, 256
      %1730 = vsyncadd [#allocation5], %s1729
      %s1731 = sshll.u32 [#allocation6], 4
      %s1732 = int_to_ptr.vmem [resolvable:$true] %s1731
      %1737 = dma.vmem_to_hbm [thread:$0]  %s1732, 256, %s6, [#allocation5], 128, 128, 8
    $region33: #{net_plain_forward.1} parent=1 // pred_fallthru
      _
    // Predicated region
    $region34: #{net_plain_forward.1} parent=1 // pred_check
      _
    $region35: #{net_plain_forward.1} parent=1 // pred_check_branch
      %1739 = sbr.rel (0) target = $region37
    $region36: #{net_plain_forward.1} parent=1 // pred_region
      %1740 = dma.done [#allocation5], 256
    $region37: #{net_plain_forward.1} parent=1 // pred_fallthru
      _
    %1741 = vsyncpa [#allocation4], 1
    %1742 = vsyncpa [#allocation5], 1

</llo_original>
